<compile_context>
chip_gen: v7x
topology: tpu7x:2x2x1
jax: 0.10.0
libtpu: 0.0.40
codegen_flags: <defaults>
</compile_context>

<pallas_src>
import functools

import jax
import jax.numpy as jnp
import numpy as np
from jax.experimental import pallas as pl
from jax.experimental.pallas import tpu as pltpu

BN_EPS = 1e-5
COMPUTE_DTYPE = jnp.bfloat16        # MXU-native matmul operands; accum stays f32
ACT_DTYPE = jnp.bfloat16            # intermediate activation storage (HBM traffic /2)
VMEM_LIMIT = 32 * 1024 * 1024       # tiny per-step footprint; safe on v5e/v6e and v7x's 64 MiB
MAX_TILE_E = 1024                   # mem-bound: >=512-lane tiles sit at ~85-86% of HBM roofline
CHAN_ALIGN = 16                     # bf16 sublane tile -> in-kernel channel slices stay tile-aligned


# ----------------------------------------------------------------- helpers --

def _round_up(x, m):
    return (x + m - 1) // m * m


def _pad_and_tile(E, B):
    """Pad the edge axis to a multiple of 128 and pick a lane-dense tile.

    Returns (Ep, te, ne) with Ep = ne * te.  When B == 1 the edge axis is split
    into >=2 tiles so both v7x TensorCores get work; v5e/v6e are single-TC and
    unaffected.  Per-step VMEM at te=1024, Cin<=256:
    2 x (5*Cin*te*2B) input double-buffer + 2 x (Cout*te*2-4B) output buffers
    + resident folded weights  <<  32 MiB scoped VMEM on all generations.
    """
    Ep = _round_up(E, 128)
    te = min(MAX_TILE_E, Ep)
    if B == 1 and Ep == te and Ep >= 256:
        te = _round_up(Ep // 2, 128)
    Ep = _round_up(Ep, te)
    return Ep, te, Ep // te


# ------------------------------------------------------------------ kernels --

def _symmetric_matmul(f_ref, wlin_ref, wabs_ref, cin_p):
    """Folded MeshConv core.

    f_ref   : (1, 5*cin_p, TE) bf16 gathered neighbour features (k-major, channel-minor)
    wlin_ref: (Cout, 5*cin_p)  bf16 == [w0, w1, w2, w1, w2]  (linear symmetric terms folded)
    wabs_ref: (Cout, 2*cin_p)  bf16 == [w3, w4]
    returns (Cout, TE) float32 accumulator.
    """
    f = f_ref[0]                                    # (5*cin_p, TE) bf16
    f1 = f[1 * cin_p:2 * cin_p]
    f2 = f[2 * cin_p:3 * cin_p]
    f3 = f[3 * cin_p:4 * cin_p]
    f4 = f[4 * cin_p:5 * cin_p]
    g_abs = jnp.concatenate([jnp.abs(f1 - f3), jnp.abs(f2 - f4)], axis=0)   # (2*cin_p, TE)
    acc = jnp.dot(wlin_ref[...], f, preferred_element_type=jnp.float32)
    acc = acc + jnp.dot(wabs_ref[...], g_abs, preferred_element_type=jnp.float32)
    return acc                                      # (Cout, TE) f32


def _conv_stats_kernel(f_ref, wlin_ref, wabs_ref, x_ref, stats_ref, acc_ref, *, cin_p):
    """MeshConv + per-channel sum/sumsq of relu(out), accumulated across edge tiles
    in VMEM scratch and written once per batch (feeds the next BatchNorm)."""
    e = pl.program_id(1)
    acc = _symmetric_matmul(f_ref, wlin_ref, wabs_ref, cin_p)   # (Cout, TE) f32
    x_ref[0] = acc.astype(x_ref.dtype)
    y = jnp.maximum(acc, 0.0)
    part = jnp.concatenate(
        [jnp.sum(y, axis=1, keepdims=True), jnp.sum(y * y, axis=1, keepdims=True)],
        axis=1)                                                  # (Cout, 2) f32

    @pl.when(e == 0)
    def _():
        acc_ref[...] = jnp.zeros_like(acc_ref)

    acc_ref[...] += part

    @pl.when(e == pl.num_programs(1) - 1)
    def _():
        stats_ref[0] = acc_ref[...]


def _conv_residual_kernel(f_ref, wlin_ref, wabs_ref, x1_ref, o_ref, *, cin_p):
    """Last MeshConv with the fused residual add + ReLU epilogue."""
    acc = _symmetric_matmul(f_ref, wlin_ref, wabs_ref, cin_p)
    o_ref[0] = jnp.maximum(acc + x1_ref[0].astype(jnp.float32), 0.0).astype(o_ref.dtype)


# ----------------------------------------------------------------- wrappers --

def _mesh_conv_stats(f, w_lin, w_abs, te):
    """f: (B, 5*cin_p, Ep) bf16 -> x: (B, Cout, Ep) bf16, stats: (B, Cout, 2) f32."""
    B, five_cin, Ep = f.shape
    cin_p = five_cin // 5
    Cout = w_lin.shape[0]
    ne = Ep // te
    return pl.pallas_call(
        functools.partial(_conv_stats_kernel, cin_p=cin_p),
        out_shape=(
            jax.ShapeDtypeStruct((B, Cout, Ep), ACT_DTYPE),
            jax.ShapeDtypeStruct((B, Cout, 2), jnp.float32),
        ),
        grid=(B, ne),
        in_specs=[
            pl.BlockSpec((1, five_cin, te), lambda b, e: (b, 0, e)),
            pl.BlockSpec((Cout, five_cin), lambda b, e: (0, 0)),      # weights resident
            pl.BlockSpec((Cout, 2 * cin_p), lambda b, e: (0, 0)),
        ],
        out_specs=(
            pl.BlockSpec((1, Cout, te), lambda b, e: (b, 0, e)),
            pl.BlockSpec((1, Cout, 2), lambda b, e: (b, 0, 0)),       # one write per batch
        ),
        scratch_shapes=[pltpu.VMEM((Cout, 2), jnp.float32)],
        compiler_params=pltpu.CompilerParams(
            dimension_semantics=("parallel", "arbitrary"),            # e carries the stats acc
            vmem_limit_bytes=VMEM_LIMIT,
        ),
    )(f, w_lin, w_abs)


def _mesh_conv_residual(f, w_lin, w_abs, x1, te):
    """Last MeshConv: out = relu(conv(f) + x1), fused epilogue.  x1 is bf16."""
    B, five_cin, Ep = f.shape
    cin_p = five_cin // 5
    Cout = w_lin.shape[0]
    ne = Ep // te
    return pl.pallas_call(
        functools.partial(_conv_residual_kernel, cin_p=cin_p),
        out_shape=jax.ShapeDtypeStruct((B, Cout, Ep), jnp.float32),
        grid=(B, ne),
        in_specs=[
            pl.BlockSpec((1, five_cin, te), lambda b, e: (b, 0, e)),
            pl.BlockSpec((Cout, five_cin), lambda b, e: (0, 0)),
            pl.BlockSpec((Cout, 2 * cin_p), lambda b, e: (0, 0)),
            pl.BlockSpec((1, Cout, te), lambda b, e: (b, 0, e)),
        ],
        out_specs=pl.BlockSpec((1, Cout, te), lambda b, e: (b, 0, e)),
        compiler_params=pltpu.CompilerParams(
            dimension_semantics=("parallel", "parallel"),
            vmem_limit_bytes=VMEM_LIMIT,
        ),
    )(f, w_lin, w_abs, x1)


# ------------------------------------------------------- XLA-side glue (thin) --

def _gather_neighbors(y, gi, cin_p, ep):
    """MeshConv.create_GeMM gather, kept in XLA but lane-axis preserving.

    y : (B, C, Ey) activations (any float dtype), Ey >= E
    gi: (B, E, 5) int32 GeMM indices (-1 = padded neighbour, column 0 = self)
    returns f: (B, 5*cin_p, ep) bf16 with
        f[b, k*cin_p + c, e] = padded_y[b, c, gi[b, e, k] + 1]
    (zero rows for padded channels, zero columns for padded edges).
    """
    # TODO(synk): fuse this gather into the conv kernel (y resident in VMEM +
    # scalar-prefetched gi, DMA/dynamic gather) to remove the last full-size
    # HBM materialization of the 5*C-wide feature tensor.
    B, C, _ = y.shape
    E = gi.shape[1]
    y = y.astype(COMPUTE_DTYPE)
    if C < cin_p:                                       # sublane-align the channel axis
        y = jnp.concatenate([y, jnp.zeros((B, cin_p - C, y.shape[2]), y.dtype)], axis=1)
    yp = jnp.concatenate([jnp.zeros((B, cin_p, 1), y.dtype), y], axis=2)   # col 0 = zeros
    idx = (gi + 1).astype(jnp.int32)                                        # -1 -> 0
    if E < ep:                                          # padded edges gather the zero column
        idx = jnp.concatenate([idx, jnp.zeros((B, ep - E, 5), jnp.int32)], axis=1)
    idx_t = jnp.transpose(idx, (0, 2, 1))               # (B, 5, ep)

    def one(ypb, idxb):                                 # (cin_p, Ey+1), (5, ep)
        g = ypb[:, idxb]                                # (cin_p, 5, ep) - E stays on lanes
        return jnp.transpose(g, (1, 0, 2))              # cheap swap of the two small leading dims

    f = jax.vmap(one)(yp, idx_t)                        # (B, 5, cin_p, ep)
    return f.reshape(B, 5 * cin_p, ep)


def _fold_weight(w, cin_p):
    """PyTorch Conv2d(kernel=(1,5)) weight (Cout, Cin, 5) -> folded bf16 matrices.

    The linear symmetric terms f0, f1+f3, f2+f4 are absorbed into
    W_lin = [w0, w1, w2, w1, w2]; the abs terms keep W_abs = [w3, w4]."""
    wk = jnp.transpose(w, (2, 0, 1))                    # (5, Cout, Cin)
    cin = wk.shape[2]
    if cin < cin_p:
        wk = jnp.pad(wk, ((0, 0), (0, 0), (0, cin_p - cin)))
    w0, w1, w2, w3, w4 = wk[0], wk[1], wk[2], wk[3], wk[4]
    w_lin = jnp.concatenate([w0, w1, w2, w1, w2], axis=1).astype(COMPUTE_DTYPE)
    w_abs = jnp.concatenate([w3, w4], axis=1).astype(COMPUTE_DTYPE)
    return w_lin, w_abs


def _bn_affine(stats, gamma, beta, count):
    """Fold training-mode BatchNorm into a per-channel scale/shift from the
    sum/sumsq accumulated inside the previous conv kernel (one-pass variance)."""
    sums = jnp.sum(stats, axis=0)                       # (Cout, 2)
    mean = sums[:, 0] / count
    var = jnp.maximum(sums[:, 1] / count - mean * mean, 0.0)
    scale = gamma * jax.lax.rsqrt(var + BN_EPS)
    shift = beta - mean * scale
    return scale, shift


def mres_conv_forward(x, gi, params, skips=1):
    """MResConv.forward: conv0 -> [bn(relu) -> conv]*skips -> +residual -> relu.

    x in (B, C, E) layout (== PyTorch (B, C, E, 1) squeezed)."""
    B, cin, E = x.shape
    Ep, te, _ = _pad_and_tile(E, B)
    count = jnp.float32(B * E)                          # BN count uses the *unpadded* edges

    cin_p0 = _round_up(cin, CHAN_ALIGN)
    w_lin, w_abs = _fold_weight(params["w0"], cin_p0)
    f = _gather_neighbors(x, gi, cin_p0, Ep)
    x_out, stats = _mesh_conv_stats(f, w_lin, w_abs, te)
    x1 = x_out                                          # residual carry (bf16)
    cout = x_out.shape[1]
    cin_p = _round_up(cout, CHAN_ALIGN)

    for i in range(1, skips + 1):
        scale, shift = _bn_affine(stats, params[f"gamma{i}"], params[f"beta{i}"], count)
        # BatchNorm(ReLU(x)) is a per-channel affine of relu(x); XLA fuses it
        # (and the relu) into the gather producer, so no extra HBM pass.
        y = (jnp.maximum(x_out.astype(jnp.float32), 0.0) * scale[None, :, None]
             + shift[None, :, None])
        f = _gather_neighbors(y, gi, cin_p, Ep)
        w_lin, w_abs = _fold_weight(params[f"w{i}"], cin_p)
        if i < skips:
            x_out, stats = _mesh_conv_stats(f, w_lin, w_abs, te)
        else:
            x_out = _mesh_conv_residual(f, w_lin, w_abs, x1, te)
    return x_out[:, :, :E]


# ---------------------------------------------------------- pure-JAX reference

def _reference_forward(x, gi, params, skips=1):
    """Pure-JAX reference mirroring the kernels' precision policy: bf16 gather /
    matmul operands, f32 accumulation + BN batch statistics, bf16 activation storage."""
    B, _, E = x.shape
    count = jnp.float32(B * E)

    def meshconv(y, w):
        cin_p = _round_up(w.shape[1], CHAN_ALIGN)
        f = _gather_neighbors(y, gi, cin_p, E)                       # (B, 5*cin_p, E) bf16
        w_lin, w_abs = _fold_weight(w, cin_p)
        f1 = f[:, 1 * cin_p:2 * cin_p]
        f2 = f[:, 2 * cin_p:3 * cin_p]
        f3 = f[:, 3 * cin_p:4 * cin_p]
        f4 = f[:, 4 * cin_p:5 * cin_p]
        g_abs = jnp.concatenate([jnp.abs(f1 - f3), jnp.abs(f2 - f4)], axis=1)
        out = jnp.einsum("ok,bke->boe", w_lin.astype(jnp.float32), f.astype(jnp.float32))
        out = out + jnp.einsum("ok,bke->boe", w_abs.astype(jnp.float32),
                               g_abs.astype(jnp.float32))
        return out                                                    # (B, Cout, E) f32

    xf = meshconv(x, params["w0"])            # f32 conv0 accumulator
    x_store = xf.astype(ACT_DTYPE)            # what the kernel writes to HBM
    x1 = x_store
    for i in range(1, skips + 1):
        y_relu = jnp.maximum(xf, 0.0)         # stats come from the f32 accumulator
        mean = jnp.sum(y_relu, axis=(0, 2)) / count
        var = jnp.maximum(jnp.sum(y_relu * y_relu, axis=(0, 2)) / count - mean * mean, 0.0)
        scale = params[f"gamma{i}"] * jax.lax.rsqrt(var + BN_EPS)
        shift = params[f"beta{i}"] - mean * scale
        y = (jnp.maximum(x_store.astype(jnp.float32), 0.0) * scale[None, :, None]
             + shift[None, :, None])
        xf = meshconv(y, params[f"w{i}"])
        x_store = xf.astype(ACT_DTYPE)
    return jnp.maximum(xf + x1.astype(jnp.float32), 0.0)


# --------------------------------------------------------------------- main --

if __name__ == "__main__":
    B, E = 2, 1024
    in_channels, out_channels, skips = 5, 16, 1

    key = jax.random.PRNGKey(0)
    k_x, k_gemm, k_w0, k_w1 = jax.random.split(key, 4)

    # PyTorch-side input would be NCHW (B, in_channels, E, 1); we carry (B, C, E).
    x = jax.random.normal(k_x, (B, in_channels, E), jnp.float32)

    # synthetic mesh: 4 GeMM neighbours per edge (-1 = padded neighbour), col 0 = self
    neighbours = jax.random.randint(k_gemm, (B, E, 4), -1, E, jnp.int32)
    self_idx = jnp.broadcast_to(
        jnp.arange(E, dtype=jnp.int32)[None, :, None], (B, E, 1)
    )
    gi = jnp.concatenate([self_idx, neighbours], axis=2)              # (B, E, 5)

    # MeshConv weights (bias=False) and BatchNorm gamma/beta at PyTorch init
    params = {
        "w0": 0.1 * jax.random.normal(k_w0, (out_channels, in_channels, 5), jnp.float32),
        "gamma1": jnp.ones((out_channels,), jnp.float32),
        "beta1": jnp.zeros((out_channels,), jnp.float32),
        "w1": 0.1 * jax.random.normal(k_w1, (out_channels, out_channels, 5), jnp.float32),
    }

    fwd = jax.jit(functools.partial(mres_conv_forward, skips=skips))
    out = jax.block_until_ready(fwd(x, gi, params))
    ref = jax.block_until_ready(_reference_forward(x, gi, params, skips=skips))

    assert out.shape == (B, out_channels, E)
    np.testing.assert_allclose(np.asarray(out), np.asarray(ref), rtol=2e-2, atol=2e-2)
    print("KERNEL_OK")
</pallas_src>

<mosaic_0001>
module attributes {stable_mosaic.version = 11 : i64} {
  func.func @_conv_stats_kernel(%arg0: i32, %arg1: i32, %arg2: memref<1x80x1024xbf16, #tpu.memory_space<vmem>>, %arg3: memref<16x80xbf16, #tpu.memory_space<vmem>>, %arg4: memref<16x32xbf16, #tpu.memory_space<vmem>>, %arg5: memref<1x16x1024xbf16, #tpu.memory_space<vmem>>, %arg6: memref<1x16x2xf32, #tpu.memory_space<vmem>>, %arg7: memref<16x2xf32, #tpu.memory_space<vmem>>) attributes {dimension_semantics = [#tpu.dimension_semantics<parallel>, #tpu.dimension_semantics<arbitrary>], iteration_bounds = array<i64: 2, 1>, scalar_prefetch = 0 : i64, scratch_operands = 1 : i64, tpu.core_type = #tpu.core_type<tc>, window_params = [{transform_indices = @transform_0, window_bounds = array<i64: 1, 80, 1024>}, {pipeline_mode = #tpu.pipeline_mode<synchronous>, transform_indices = @transform_1, window_bounds = array<i64: 16, 80>}, {pipeline_mode = #tpu.pipeline_mode<synchronous>, transform_indices = @transform_2, window_bounds = array<i64: 16, 32>}, {transform_indices = @transform_3, window_bounds = array<i64: 1, 16, 1024>}, {transform_indices = @transform_4, window_bounds = array<i64: 1, 16, 2>}]} {
    %c0 = arith.constant 0 : index
    %c0_0 = arith.constant 0 : index
    %c0_1 = arith.constant 0 : index
    %0 = vector.load %arg2[%c0, %c0_0, %c0_1] : memref<1x80x1024xbf16, #tpu.memory_space<vmem>>, vector<1x80x1024xbf16>
    %1 = vector.shape_cast %0 : vector<1x80x1024xbf16> to vector<80x1024xbf16>
    %2 = vector.extract_strided_slice %1 {offsets = [16, 0], sizes = [16, 1024], strides = [1, 1]} : vector<80x1024xbf16> to vector<16x1024xbf16>
    %3 = vector.extract_strided_slice %1 {offsets = [32, 0], sizes = [16, 1024], strides = [1, 1]} : vector<80x1024xbf16> to vector<16x1024xbf16>
    %4 = vector.extract_strided_slice %1 {offsets = [48, 0], sizes = [16, 1024], strides = [1, 1]} : vector<80x1024xbf16> to vector<16x1024xbf16>
    %5 = vector.extract_strided_slice %1 {offsets = [64, 0], sizes = [16, 1024], strides = [1, 1]} : vector<80x1024xbf16> to vector<16x1024xbf16>
    %6 = arith.subf %2, %4 : vector<16x1024xbf16>
    %7 = math.absf %6 : vector<16x1024xbf16>
    %8 = arith.subf %3, %5 : vector<16x1024xbf16>
    %9 = math.absf %8 : vector<16x1024xbf16>
    %10 = tpu.concatenate %7, %9 in 0 : vector<16x1024xbf16>, vector<16x1024xbf16> -> vector<32x1024xbf16>
    %c0_2 = arith.constant 0 : index
    %c0_3 = arith.constant 0 : index
    %11 = vector.load %arg3[%c0_2, %c0_3] : memref<16x80xbf16, #tpu.memory_space<vmem>>, vector<16x80xbf16>
    %cst = arith.constant dense<0.000000e+00> : vector<16x1024xf32>
    %12 = tpu.matmul %11, %1, %cst {dimension_numbers = #tpu.dot_dimension_numbers<[1], [0], [0], [1], [0, 0, 1, 1], [], []>} : vector<16x80xbf16>, vector<80x1024xbf16>, vector<16x1024xf32> -> vector<16x1024xf32>
    %c0_4 = arith.constant 0 : index
    %c0_5 = arith.constant 0 : index
    %13 = vector.load %arg4[%c0_4, %c0_5] : memref<16x32xbf16, #tpu.memory_space<vmem>>, vector<16x32xbf16>
    %cst_6 = arith.constant dense<0.000000e+00> : vector<16x1024xf32>
    %14 = tpu.matmul %13, %10, %cst_6 {dimension_numbers = #tpu.dot_dimension_numbers<[1], [0], [0], [1], [0, 0, 1, 1], [], []>} : vector<16x32xbf16>, vector<32x1024xbf16>, vector<16x1024xf32> -> vector<16x1024xf32>
    %15 = arith.addf %12, %14 : vector<16x1024xf32>
    %16 = arith.truncf %15 : vector<16x1024xf32> to vector<16x1024xbf16>
    %c0_7 = arith.constant 0 : index
    %c0_8 = arith.constant 0 : index
    %c0_9 = arith.constant 0 : index
    %17 = vector.load %arg5[%c0_7, %c0_8, %c0_9] : memref<1x16x1024xbf16, #tpu.memory_space<vmem>>, vector<1x16x1024xbf16>
    %18 = vector.shape_cast %17 : vector<1x16x1024xbf16> to vector<16x1024xbf16>
    %19 = vector.shape_cast %16 : vector<16x1024xbf16> to vector<1x16x1024xbf16>
    tpu.vector_store %arg5[%c0_7, %c0_8, %c0_9], %19 {strides = array<i32>} : memref<1x16x1024xbf16, #tpu.memory_space<vmem>>, vector<1x16x1024xbf16>,
    %cst_10 = arith.constant 0.000000e+00 : f32
    %20 = vector.broadcast %cst_10 : f32 to vector<16x1024xf32>
    %21 = arith.maximumf %15, %20 : vector<16x1024xf32>
    %cst_11 = arith.constant dense<0.000000e+00> : vector<16xf32>
    %22 = vector.multi_reduction <add>, %21, %cst_11 [1] : vector<16x1024xf32> to vector<16xf32>
    %23 = vector.shape_cast %22 : vector<16xf32> to vector<16x1xf32>
    %24 = arith.mulf %21, %21 : vector<16x1024xf32>
    %cst_12 = arith.constant dense<0.000000e+00> : vector<16xf32>
    %25 = vector.multi_reduction <add>, %24, %cst_12 [1] : vector<16x1024xf32> to vector<16xf32>
    %26 = vector.shape_cast %25 : vector<16xf32> to vector<16x1xf32>
    %27 = tpu.concatenate %23, %26 in 1 : vector<16x1xf32>, vector<16x1xf32> -> vector<16x2xf32>
    %c0_i32 = arith.constant 0 : i32
    %28 = arith.cmpi eq, %arg1, %c0_i32 : i32
    %29 = arith.extui %28 : i1 to i32
    %c0_i32_13 = arith.constant 0 : i32
    %30 = arith.cmpi ne, %29, %c0_i32_13 : i32
    scf.if %30 {
      %cst_20 = arith.constant 0.000000e+00 : f32
      %37 = vector.broadcast %cst_20 : f32 to vector<16x2xf32>
      %c0_21 = arith.constant 0 : index
      %c0_22 = arith.constant 0 : index
      %38 = vector.load %arg7[%c0_21, %c0_22] : memref<16x2xf32, #tpu.memory_space<vmem>>, vector<16x2xf32>
      tpu.vector_store %arg7[%c0_21, %c0_22], %37 {strides = array<i32>} : memref<16x2xf32, #tpu.memory_space<vmem>>, vector<16x2xf32>,
    } else {
    }
    %c0_14 = arith.constant 0 : index
    %c0_15 = arith.constant 0 : index
    %31 = vector.load %arg7[%c0_14, %c0_15] : memref<16x2xf32, #tpu.memory_space<vmem>>, vector<16x2xf32>
    %32 = arith.addf %31, %27 : vector<16x2xf32>
    %c0_16 = arith.constant 0 : index
    %c0_17 = arith.constant 0 : index
    %33 = vector.load %arg7[%c0_16, %c0_17] : memref<16x2xf32, #tpu.memory_space<vmem>>, vector<16x2xf32>
    tpu.vector_store %arg7[%c0_16, %c0_17], %32 {strides = array<i32>} : memref<16x2xf32, #tpu.memory_space<vmem>>, vector<16x2xf32>,
    %c0_i32_18 = arith.constant 0 : i32
    %34 = arith.cmpi eq, %arg1, %c0_i32_18 : i32
    %35 = arith.extui %34 : i1 to i32
    %c0_i32_19 = arith.constant 0 : i32
    %36 = arith.cmpi ne, %35, %c0_i32_19 : i32
    scf.if %36 {
      %c0_20 = arith.constant 0 : index
      %c0_21 = arith.constant 0 : index
      %37 = vector.load %arg7[%c0_20, %c0_21] : memref<16x2xf32, #tpu.memory_space<vmem>>, vector<16x2xf32>
      %c0_22 = arith.constant 0 : index
      %c0_23 = arith.constant 0 : index
      %c0_24 = arith.constant 0 : index
      %38 = vector.load %arg6[%c0_22, %c0_23, %c0_24] : memref<1x16x2xf32, #tpu.memory_space<vmem>>, vector<1x16x2xf32>
      %39 = vector.shape_cast %38 : vector<1x16x2xf32> to vector<16x2xf32>
      %40 = vector.shape_cast %37 : vector<16x2xf32> to vector<1x16x2xf32>
      tpu.vector_store %arg6[%c0_22, %c0_23, %c0_24], %40 {strides = array<i32>} : memref<1x16x2xf32, #tpu.memory_space<vmem>>, vector<1x16x2xf32>,
    } else {
    }
    return
  }
  func.func @transform_0(%arg0: i32, %arg1: i32) -> (i32, i32, i32) {
    %c0_i32 = arith.constant 0 : i32
    %c0_i32_0 = arith.constant 0 : i32
    return %arg0, %c0_i32, %arg1 : i32, i32, i32
  }
  func.func @transform_1(%arg0: i32, %arg1: i32) -> (i32, i32) {
    %c0_i32 = arith.constant 0 : i32
    %c0_i32_0 = arith.constant 0 : i32
    %c0_i32_1 = arith.constant 0 : i32
    return %c0_i32, %c0_i32_0 : i32, i32
  }
  func.func @transform_2(%arg0: i32, %arg1: i32) -> (i32, i32) {
    %c0_i32 = arith.constant 0 : i32
    %c0_i32_0 = arith.constant 0 : i32
    %c0_i32_1 = arith.constant 0 : i32
    return %c0_i32, %c0_i32_0 : i32, i32
  }
  func.func @transform_3(%arg0: i32, %arg1: i32) -> (i32, i32, i32) {
    %c0_i32 = arith.constant 0 : i32
    %c0_i32_0 = arith.constant 0 : i32
    return %arg0, %c0_i32, %arg1 : i32, i32, i32
  }
  func.func @transform_4(%arg0: i32, %arg1: i32) -> (i32, i32, i32) {
    %c0_i32 = arith.constant 0 : i32
    %c0_i32_0 = arith.constant 0 : i32
    %c0_i32_1 = arith.constant 0 : i32
    return %arg0, %c0_i32, %c0_i32_0 : i32, i32, i32
  }
}

module attributes {stable_mosaic.version = 11 : i64} {
  func.func @_conv_residual_kernel(%arg0: i32, %arg1: i32, %arg2: memref<1x80x1024xbf16, #tpu.memory_space<vmem>>, %arg3: memref<16x80xbf16, #tpu.memory_space<vmem>>, %arg4: memref<16x32xbf16, #tpu.memory_space<vmem>>, %arg5: memref<1x16x1024xbf16, #tpu.memory_space<vmem>>, %arg6: memref<1x16x1024xf32, #tpu.memory_space<vmem>>) attributes {dimension_semantics = [#tpu.dimension_semantics<parallel>, #tpu.dimension_semantics<parallel>], iteration_bounds = array<i64: 2, 1>, scalar_prefetch = 0 : i64, scratch_operands = 0 : i64, tpu.core_type = #tpu.core_type<tc>, window_params = [{transform_indices = @transform_0, window_bounds = array<i64: 1, 80, 1024>}, {pipeline_mode = #tpu.pipeline_mode<synchronous>, transform_indices = @transform_1, window_bounds = array<i64: 16, 80>}, {pipeline_mode = #tpu.pipeline_mode<synchronous>, transform_indices = @transform_2, window_bounds = array<i64: 16, 32>}, {transform_indices = @transform_3, window_bounds = array<i64: 1, 16, 1024>}, {transform_indices = @transform_4, window_bounds = array<i64: 1, 16, 1024>}]} {
    %c0 = arith.constant 0 : index
    %c0_0 = arith.constant 0 : index
    %c0_1 = arith.constant 0 : index
    %0 = vector.load %arg2[%c0, %c0_0, %c0_1] : memref<1x80x1024xbf16, #tpu.memory_space<vmem>>, vector<1x80x1024xbf16>
    %1 = vector.shape_cast %0 : vector<1x80x1024xbf16> to vector<80x1024xbf16>
    %2 = vector.extract_strided_slice %1 {offsets = [16, 0], sizes = [16, 1024], strides = [1, 1]} : vector<80x1024xbf16> to vector<16x1024xbf16>
    %3 = vector.extract_strided_slice %1 {offsets = [32, 0], sizes = [16, 1024], strides = [1, 1]} : vector<80x1024xbf16> to vector<16x1024xbf16>
    %4 = vector.extract_strided_slice %1 {offsets = [48, 0], sizes = [16, 1024], strides = [1, 1]} : vector<80x1024xbf16> to vector<16x1024xbf16>
    %5 = vector.extract_strided_slice %1 {offsets = [64, 0], sizes = [16, 1024], strides = [1, 1]} : vector<80x1024xbf16> to vector<16x1024xbf16>
    %6 = arith.subf %2, %4 : vector<16x1024xbf16>
    %7 = math.absf %6 : vector<16x1024xbf16>
    %8 = arith.subf %3, %5 : vector<16x1024xbf16>
    %9 = math.absf %8 : vector<16x1024xbf16>
    %10 = tpu.concatenate %7, %9 in 0 : vector<16x1024xbf16>, vector<16x1024xbf16> -> vector<32x1024xbf16>
    %c0_2 = arith.constant 0 : index
    %c0_3 = arith.constant 0 : index
    %11 = vector.load %arg3[%c0_2, %c0_3] : memref<16x80xbf16, #tpu.memory_space<vmem>>, vector<16x80xbf16>
    %cst = arith.constant dense<0.000000e+00> : vector<16x1024xf32>
    %12 = tpu.matmul %11, %1, %cst {dimension_numbers = #tpu.dot_dimension_numbers<[1], [0], [0], [1], [0, 0, 1, 1], [], []>} : vector<16x80xbf16>, vector<80x1024xbf16>, vector<16x1024xf32> -> vector<16x1024xf32>
    %c0_4 = arith.constant 0 : index
    %c0_5 = arith.constant 0 : index
    %13 = vector.load %arg4[%c0_4, %c0_5] : memref<16x32xbf16, #tpu.memory_space<vmem>>, vector<16x32xbf16>
    %cst_6 = arith.constant dense<0.000000e+00> : vector<16x1024xf32>
    %14 = tpu.matmul %13, %10, %cst_6 {dimension_numbers = #tpu.dot_dimension_numbers<[1], [0], [0], [1], [0, 0, 1, 1], [], []>} : vector<16x32xbf16>, vector<32x1024xbf16>, vector<16x1024xf32> -> vector<16x1024xf32>
    %15 = arith.addf %12, %14 : vector<16x1024xf32>
    %c0_7 = arith.constant 0 : index
    %c0_8 = arith.constant 0 : index
    %c0_9 = arith.constant 0 : index
    %16 = vector.load %arg5[%c0_7, %c0_8, %c0_9] : memref<1x16x1024xbf16, #tpu.memory_space<vmem>>, vector<1x16x1024xbf16>
    %17 = vector.shape_cast %16 : vector<1x16x1024xbf16> to vector<16x1024xbf16>
    %18 = arith.extf %17 : vector<16x1024xbf16> to vector<16x1024xf32>
    %19 = arith.addf %15, %18 : vector<16x1024xf32>
    %cst_10 = arith.constant 0.000000e+00 : f32
    %20 = vector.broadcast %cst_10 : f32 to vector<16x1024xf32>
    %21 = arith.maximumf %19, %20 : vector<16x1024xf32>
    %c0_11 = arith.constant 0 : index
    %c0_12 = arith.constant 0 : index
    %c0_13 = arith.constant 0 : index
    %22 = vector.load %arg6[%c0_11, %c0_12, %c0_13] : memref<1x16x1024xf32, #tpu.memory_space<vmem>>, vector<1x16x1024xf32>
    %23 = vector.shape_cast %22 : vector<1x16x1024xf32> to vector<16x1024xf32>
    %24 = vector.shape_cast %21 : vector<16x1024xf32> to vector<1x16x1024xf32>
    tpu.vector_store %arg6[%c0_11, %c0_12, %c0_13], %24 {strides = array<i32>} : memref<1x16x1024xf32, #tpu.memory_space<vmem>>, vector<1x16x1024xf32>,
    return
  }
  func.func @transform_0(%arg0: i32, %arg1: i32) -> (i32, i32, i32) {
    %c0_i32 = arith.constant 0 : i32
    %c0_i32_0 = arith.constant 0 : i32
    return %arg0, %c0_i32, %arg1 : i32, i32, i32
  }
  func.func @transform_1(%arg0: i32, %arg1: i32) -> (i32, i32) {
    %c0_i32 = arith.constant 0 : i32
    %c0_i32_0 = arith.constant 0 : i32
    %c0_i32_1 = arith.constant 0 : i32
    return %c0_i32, %c0_i32_0 : i32, i32
  }
  func.func @transform_2(%arg0: i32, %arg1: i32) -> (i32, i32) {
    %c0_i32 = arith.constant 0 : i32
    %c0_i32_0 = arith.constant 0 : i32
    %c0_i32_1 = arith.constant 0 : i32
    return %c0_i32, %c0_i32_0 : i32, i32
  }
  func.func @transform_3(%arg0: i32, %arg1: i32) -> (i32, i32, i32) {
    %c0_i32 = arith.constant 0 : i32
    %c0_i32_0 = arith.constant 0 : i32
    return %arg0, %c0_i32, %arg1 : i32, i32, i32
  }
  func.func @transform_4(%arg0: i32, %arg1: i32) -> (i32, i32, i32) {
    %c0_i32 = arith.constant 0 : i32
    %c0_i32_0 = arith.constant 0 : i32
    return %arg0, %c0_i32, %arg1 : i32, i32, i32
  }
}

</mosaic_0001>

<llo_original>
// kernel: mres_conv_forward.2
$region0: #{mres_conv_forward.2}
  #allocation0 [shape = 'u32[]', space=smem, size = 0x4, offset = 0x4, fixed_abs, tag = 'smem constant byte address 0x4 - core index']
  #allocation1 [shape = 'u32[144,128]{1,0:T(1,128)}', space=vmem, size = 0x12000, scoped, tag = 'internal scratch']
  #allocation2 [shape = 'f32[16,2]{1,0:T(8,128)}', space=vmem, size = 0x2000, scoped, tag = 'scratch operand']
  %s0 = inlined_call_operand.vmem [shape: bf16[2,80,1024], index: 0, kind: input, shape index: {}]
  %s1 = inlined_call_operand.vmem [shape: bf16[16,80], index: 1, kind: input, shape index: {}]
  %s2 = inlined_call_operand.vmem [shape: bf16[16,32], index: 2, kind: input, shape index: {}]
  %s3 = inlined_call_operand.vmem [shape: bf16[2,16,1024], index: 3, kind: output, shape index: {0}]
  %s4 = inlined_call_operand.vmem [shape: f32[2,16,2], index: 4, kind: output, shape index: {1}]
  %5 = xla_tuple %s3, %s4
  %s6 = sld [smem:[#allocation0]]
  $region61: #{mres_conv_forward.2} parent=0
    _
  %s8 = ssub.s32 1, %s6
  %s9 = scalar_select 0, %s8, %s6
  loop: start=0, step=1, limit=4
  $region2: #{mres_conv_forward.2} parent=0 // loop_pre_header
    _
  $region3: #{mres_conv_forward.2} parent=0 // loop_header
    %s11 = sphi 0, %s15
    %p12 = scmp.ge.s32.totalorder %s11, 4
    %s18 = sphi 0, %s30
    %s19 = sphi 0, %s26
    %s20 = sphi 0, %s18
    %s21 = sphi 0, %s19
    %s22 = sphi 0, %s20
    %s23 = sphi 0, %s21
    %s35 = sphi 0, %s37
    %s38 = sphi 0, %s35
    %s39 = sphi 0, %s38
    %s55 = sphi 0, %s39
    %s59 = sphi 0, %s59
    %s61 = sphi 0, %s59
    %s62 = sphi 0, %s61
    %s76 = sphi 0, %s62
    %s80 = sphi 0, %s80
    %s82 = sphi 0, %s80
    %s83 = sphi 0, %s82
    %s97 = sphi 0, %s83
    %s105 = sphi 0, %s107
    %s108 = sphi 0, %s105
    %s109 = sphi 0, %s108
    %s125 = sphi 0, %s109
    %s131 = sphi 0, %s133
    %s134 = sphi 0, %s131
    %s135 = sphi 0, %s134
    %s151 = sphi 0, %s135
  $region4: #{mres_conv_forward.2} parent=0 // loop_header_branch
    %14 = sbr.rel (%p12) target = $region8
  $region5: #{mres_conv_forward.2} parent=0 // loop_body
    %s16 = ssub.s32 %s11, 1
    %s17 = ssub.s32 %s11, 2
    %s24 = sadd.s32 1, %s19
    %p25 = scmp.ge.s32.totalorder %s24, 1
    %s26 = scalar_select %p25, 0, %s24
    %s27 = sadd.s32 1, %s18
    %s28 = scalar_select %p25, %s27, %s18
    %p29 = scmp.ge.s32.totalorder %s28, 2
    %s30 = scalar_select %p29, 0, %s28
    %s31 = ssub.s32 %s18, %s30
    %s32 = ssub.s32 %s19, %s26
    %s33 = sor.u32 %s31, %s32
    %p34 = scmp.eq.s32.totalorder %s33, 0
    %s36 = sadd.s32 %s35, 1
    %s37 = scalar_select %p34, %s35, %s36
    %p40 = pneg %p34
    %p41 = scmp.eq.s32.totalorder %s11, 1
    %p42 = por %p40, %p41
    %p43 = scmp.ne.s32.totalorder %s35, %s38
    %p44 = scmp.eq.s32.totalorder %s11, 0
    %p45 = por %p43, %p44
    %p46 = scmp.ne.s32.totalorder %s35, %s38
    %p47 = scmp.eq.s32.totalorder %s16, 1
    %p48 = por %p46, %p47
    %p49 = scmp.ne.s32.totalorder %s38, %s39
    %p50 = scmp.eq.s32.totalorder %s16, 0
    %p51 = por %p49, %p50
    %p52 = scmp.ne.s32.totalorder %s38, %s39
    %p53 = scmp.eq.s32.totalorder %s17, 1
    %p54 = por %p52, %p53
    %p56 = scmp.ne.s32.totalorder %s39, %s55
    %p57 = scmp.eq.s32.totalorder %s17, 0
    %p58 = por %p56, %p57
    %s60 = sadd.s32 %s59, 1
    %p63 = scmp.eq.s32.totalorder %s11, 1
    %p64 = scmp.ne.s32.totalorder %s59, %s61
    %p65 = scmp.eq.s32.totalorder %s11, 0
    %p66 = por %p64, %p65
    %p67 = scmp.ne.s32.totalorder %s59, %s61
    %p68 = scmp.eq.s32.totalorder %s16, 1
    %p69 = por %p67, %p68
    %p70 = scmp.ne.s32.totalorder %s61, %s62
    %p71 = scmp.eq.s32.totalorder %s16, 0
    %p72 = por %p70, %p71
    %p73 = scmp.ne.s32.totalorder %s61, %s62
    %p74 = scmp.eq.s32.totalorder %s17, 1
    %p75 = por %p73, %p74
    %p77 = scmp.ne.s32.totalorder %s62, %s76
    %p78 = scmp.eq.s32.totalorder %s17, 0
    %p79 = por %p77, %p78
    %s81 = sadd.s32 %s80, 1
    %p84 = scmp.eq.s32.totalorder %s11, 1
    %p85 = scmp.ne.s32.totalorder %s80, %s82
    %p86 = scmp.eq.s32.totalorder %s11, 0
    %p87 = por %p85, %p86
    %p88 = scmp.ne.s32.totalorder %s80, %s82
    %p89 = scmp.eq.s32.totalorder %s16, 1
    %p90 = por %p88, %p89
    %p91 = scmp.ne.s32.totalorder %s82, %s83
    %p92 = scmp.eq.s32.totalorder %s16, 0
    %p93 = por %p91, %p92
    %p94 = scmp.ne.s32.totalorder %s82, %s83
    %p95 = scmp.eq.s32.totalorder %s17, 1
    %p96 = por %p94, %p95
    %p98 = scmp.ne.s32.totalorder %s83, %s97
    %p99 = scmp.eq.s32.totalorder %s17, 0
    %p100 = por %p98, %p99
    %s101 = ssub.s32 %s18, %s30
    %s102 = ssub.s32 %s19, %s26
    %s103 = sor.u32 %s101, %s102
    %p104 = scmp.eq.s32.totalorder %s103, 0
    %s106 = sadd.s32 %s105, 1
    %s107 = scalar_select %p104, %s105, %s106
    %p110 = pneg %p104
    %p111 = scmp.eq.s32.totalorder %s11, 1
    %p112 = por %p110, %p111
    %p113 = scmp.ne.s32.totalorder %s105, %s108
    %p114 = scmp.eq.s32.totalorder %s11, 0
    %p115 = por %p113, %p114
    %p116 = scmp.ne.s32.totalorder %s105, %s108
    %p117 = scmp.eq.s32.totalorder %s16, 1
    %p118 = por %p116, %p117
    %p119 = scmp.ne.s32.totalorder %s108, %s109
    %p120 = scmp.eq.s32.totalorder %s16, 0
    %p121 = por %p119, %p120
    %p122 = scmp.ne.s32.totalorder %s108, %s109
    %p123 = scmp.eq.s32.totalorder %s17, 1
    %p124 = por %p122, %p123
    %p126 = scmp.ne.s32.totalorder %s109, %s125
    %p127 = scmp.eq.s32.totalorder %s17, 0
    %p128 = por %p126, %p127
    %s129 = ssub.s32 %s18, %s30
    %p130 = scmp.eq.s32.totalorder %s129, 0
    %s132 = sadd.s32 %s131, 1
    %s133 = scalar_select %p130, %s131, %s132
    %p136 = pneg %p130
    %p137 = scmp.eq.s32.totalorder %s11, 1
    %p138 = por %p136, %p137
    %p139 = scmp.ne.s32.totalorder %s131, %s134
    %p140 = scmp.eq.s32.totalorder %s11, 0
    %p141 = por %p139, %p140
    %p142 = scmp.ne.s32.totalorder %s131, %s134
    %p143 = scmp.eq.s32.totalorder %s16, 1
    %p144 = por %p142, %p143
    %p145 = scmp.ne.s32.totalorder %s134, %s135
    %p146 = scmp.eq.s32.totalorder %s16, 0
    %p147 = por %p145, %p146
    %p148 = scmp.ne.s32.totalorder %s134, %s135
    %p149 = scmp.eq.s32.totalorder %s17, 1
    %p150 = por %p148, %p149
    %p152 = scmp.ne.s32.totalorder %s135, %s151
    %p153 = scmp.eq.s32.totalorder %s17, 0
    %p154 = por %p152, %p153
    %p155 = scmp.le.s32.totalorder 1, %s11
    %p156 = scmp.lt.s32.totalorder %s11, 3
    %p157 = pnand %p155, %p156
    %p158 = pneg %p157
    // Predicated region
    $region9: #{mres_conv_forward.2} parent=5 // pred_check
      _
    $region10: #{mres_conv_forward.2} parent=5 // pred_check_branch
      %160 = sbr.rel (%p157) target = $region12
    $region11: #{mres_conv_forward.2} parent=5 // pred_region
      %s161 = ssub.s32 %s11, 1
      // Predicated region
      $region13: #{mres_conv_forward.2} parent=11 // pred_check
        %p162 = pneg %p72
      $region14: #{mres_conv_forward.2} parent=11 // pred_check_branch
        %164 = sbr.rel (%p162) target = $region16
      $region15: #{mres_conv_forward.2} parent=11 // pred_region
        _
      $region16: #{mres_conv_forward.2} parent=11 // pred_fallthru
        _
      // Predicated region
      $region17: #{mres_conv_forward.2} parent=11 // pred_check
        %p165 = pneg %p93
      $region18: #{mres_conv_forward.2} parent=11 // pred_check_branch
        %167 = sbr.rel (%p165) target = $region20
      $region19: #{mres_conv_forward.2} parent=11 // pred_region
        _
      $region20: #{mres_conv_forward.2} parent=11 // pred_fallthru
        _
    $region12: #{mres_conv_forward.2} parent=5 // pred_fallthru
      _
    %p168 = scmp.lt.s32.totalorder %s11, 2
    // Predicated region
    $region21: #{mres_conv_forward.2} parent=5 // pred_check
      %p169 = pneg %p168
    $region22: #{mres_conv_forward.2} parent=5 // pred_check_branch
      %171 = sbr.rel (%p169) target = $region24
    $region23: #{mres_conv_forward.2} parent=5 // pred_region
      // Predicated region
      $region25: #{mres_conv_forward.2} parent=23 // pred_check
        %p172 = pneg %p45
      $region26: #{mres_conv_forward.2} parent=23 // pred_check_branch
        %174 = sbr.rel (%p172) target = $region28
      $region27: #{mres_conv_forward.2} parent=23 // pred_region
        %s175 = smul.u32 8, %s19
        %p176 = scmp.lt.s32.totalorder %s18, 1
        %s177 = scalar_select %p176, %s18, 1
        %p178 = scmp.lt.s32.totalorder %s175, 7
        %s179 = scalar_select %p178, %s175, 7
        %s180 = smul.addr %s177, 80
        %s181 = sadd.s32 %s179, %s180
        %s182 = smul.addr %s181, 4
        %s183 = scalar_lea.vmem %s0, %s182
        %s184 = smul.u32 8, %s19
      $region28: #{mres_conv_forward.2} parent=23 // pred_fallthru
        _
    $region24: #{mres_conv_forward.2} parent=5 // pred_fallthru
      _
    %p185 = scmp.le.s32.totalorder 1, %s11
    %p186 = scmp.lt.s32.totalorder %s11, 3
    %p187 = pnand %p185, %p186
    %p188 = pneg %p187
    // Predicated region
    $region29: #{mres_conv_forward.2} parent=5 // pred_check
      _
    $region30: #{mres_conv_forward.2} parent=5 // pred_check_branch
      %190 = sbr.rel (%p187) target = $region32
    $region31: #{mres_conv_forward.2} parent=5 // pred_region
      %s191 = ssub.s32 %s11, 1
      %s192 = smul.u32 8, %s21
      %p193 = scmp.lt.s32.totalorder %s20, 1
      %s194 = scalar_select %p193, %s20, 1
      %p195 = scmp.lt.s32.totalorder %s192, 7
      %s196 = scalar_select %p195, %s192, 7
      %s197 = smul.addr %s194, 80
      %s198 = sadd.s32 %s196, %s197
      %s199 = smul.addr %s198, 4
      %s200 = scalar_lea.vmem %s0, %s199
      %p201 = pneg %p51
      %p202 = pneg %p48
      %p203 = pneg %p72
      %p204 = pneg %p69
      %p205 = pneg %p93
      %p206 = pneg %p90
      %p207 = pneg %p121
      %p208 = pneg %p118
      %s209 = smul.u32 8, %s21
      %p210 = scmp.lt.s32.totalorder %s20, 1
      %s211 = scalar_select %p210, %s20, 1
      %p212 = scmp.lt.s32.totalorder %s209, 7
      %s213 = scalar_select %p212, %s209, 7
      %s214 = smul.addr %s211, 16
      %s215 = sadd.s32 %s213, %s214
      %s216 = smul.addr %s215, 4
      %s217 = scalar_lea.vmem %s3, %s216
      %p218 = pneg %p147
      %p219 = pneg %p144
      %p220 = scmp.lt.s32.totalorder %s20, 1
      %s221 = scalar_select %p220, %s20, 1
      %s222 = smul.addr %s221, 2
      %s223 = smul.addr %s222, 8
      %s224 = scalar_lea.vmem %s4, %s223
      %s225 = smul.u32 8, %s21
      %p226 = scmp.lt.s32.totalorder %s20, 1
      %s227 = scalar_select %p226, %s20, 1
      %p228 = scmp.lt.s32.totalorder %s225, 7
      %s229 = scalar_select %p228, %s225, 7
      %s230 = smul.addr %s227, 80
      %s231 = sadd.s32 %s229, %s230
      %s232 = smul.addr %s231, 4
      %s233 = scalar_lea.vmem %s0, %s232
      %s234 = smul.u32 8, %s21
      %s235 = smul.u32 8, %s21
      %p236 = scmp.lt.s32.totalorder %s20, 1
      %s237 = scalar_select %p236, %s20, 1
      %p238 = scmp.lt.s32.totalorder %s235, 7
      %s239 = scalar_select %p238, %s235, 7
      %s240 = smul.addr %s237, 16
      %s241 = sadd.s32 %s239, %s240
      %s242 = smul.addr %s241, 4
      %s243 = scalar_lea.vmem %s3, %s242
      %s244 = smul.u32 8, %s21
      %p245 = scmp.lt.s32.totalorder %s20, 1
      %s246 = scalar_select %p245, %s20, 1
      %s247 = smul.addr %s246, 2
      %s248 = smul.addr %s247, 8
      %s249 = scalar_lea.vmem %s4, %s248
      %v251 = vld [vmem:[%s233] sm:$0xff]
      %v252 = vld [vmem:[%s233 + $0x8] sm:$0xff]
      %v253 = vld [vmem:[%s233 + $0x10] sm:$0xff]
      %v254 = vld [vmem:[%s233 + $0x18] sm:$0xff]
      %v255 = vld [vmem:[%s233 + $0x20] sm:$0xff]
      %v256 = vld [vmem:[%s233 + $0x28] sm:$0xff]
      %v257 = vld [vmem:[%s233 + $0x30] sm:$0xff]
      %v258 = vld [vmem:[%s233 + $0x38] sm:$0xff]
      %v259 = vld [vmem:[%s233 + $0x40] sm:$0xff]
      %v260 = vld [vmem:[%s233 + $0x48] sm:$0xff]
      %v261 = vld [vmem:[%s233 + $0x50] sm:$0xff]
      %v262 = vld [vmem:[%s233 + $0x58] sm:$0xff]
      %v263 = vld [vmem:[%s233 + $0x60] sm:$0xff]
      %v264 = vld [vmem:[%s233 + $0x68] sm:$0xff]
      %v265 = vld [vmem:[%s233 + $0x70] sm:$0xff]
      %v266 = vld [vmem:[%s233 + $0x78] sm:$0xff]
      %v267 = vld [vmem:[%s233 + $0x80] sm:$0xff]
      %v268 = vld [vmem:[%s233 + $0x88] sm:$0xff]
      %v269 = vld [vmem:[%s233 + $0x90] sm:$0xff]
      %v270 = vld [vmem:[%s233 + $0x98] sm:$0xff]
      %v271 = vld [vmem:[%s233 + $0xa0] sm:$0xff]
      %v272 = vld [vmem:[%s233 + $0xa8] sm:$0xff]
      %v273 = vld [vmem:[%s233 + $0xb0] sm:$0xff]
      %v274 = vld [vmem:[%s233 + $0xb8] sm:$0xff]
      %v275 = vld [vmem:[%s233 + $0xc0] sm:$0xff]
      %v276 = vld [vmem:[%s233 + $0xc8] sm:$0xff]
      %v277 = vld [vmem:[%s233 + $0xd0] sm:$0xff]
      %v278 = vld [vmem:[%s233 + $0xd8] sm:$0xff]
      %v279 = vld [vmem:[%s233 + $0xe0] sm:$0xff]
      %v280 = vld [vmem:[%s233 + $0xe8] sm:$0xff]
      %v281 = vld [vmem:[%s233 + $0xf0] sm:$0xff]
      %v282 = vld [vmem:[%s233 + $0xf8] sm:$0xff]
      %v283 = vld [vmem:[%s233 + $0x100] sm:$0xff]
      %v284 = vld [vmem:[%s233 + $0x108] sm:$0xff]
      %v285 = vld [vmem:[%s233 + $0x110] sm:$0xff]
      %v286 = vld [vmem:[%s233 + $0x118] sm:$0xff]
      %v287 = vld [vmem:[%s233 + $0x120] sm:$0xff]
      %v288 = vld [vmem:[%s233 + $0x128] sm:$0xff]
      %v289 = vld [vmem:[%s233 + $0x130] sm:$0xff]
      %v290 = vld [vmem:[%s233 + $0x138] sm:$0xff]
      %v291 = vsub.bf16 %v259, %v275
      %v292 = vsub.bf16 %v260, %v276
      %v293 = vsub.bf16 %v261, %v277
      %v294 = vsub.bf16 %v262, %v278
      %v295 = vsub.bf16 %v263, %v279
      %v296 = vsub.bf16 %v264, %v280
      %v297 = vsub.bf16 %v265, %v281
      %v298 = vsub.bf16 %v266, %v282
      %v299 = vand.u32 2147450879, %v291
      %v300 = vand.u32 2147450879, %v292
      %v301 = vand.u32 2147450879, %v293
      %v302 = vand.u32 2147450879, %v294
      %v303 = vand.u32 2147450879, %v295
      %v304 = vand.u32 2147450879, %v296
      %v305 = vand.u32 2147450879, %v297
      %v306 = vand.u32 2147450879, %v298
      %v307 = vsub.bf16 %v267, %v283
      %v308 = vsub.bf16 %v268, %v284
      %v309 = vsub.bf16 %v269, %v285
      %v310 = vsub.bf16 %v270, %v286
      %v311 = vsub.bf16 %v271, %v287
      %v312 = vsub.bf16 %v272, %v288
      %v313 = vsub.bf16 %v273, %v289
      %v314 = vsub.bf16 %v274, %v290
      %v315 = vand.u32 2147450879, %v307
      %v316 = vand.u32 2147450879, %v308
      %v317 = vand.u32 2147450879, %v309
      %v318 = vand.u32 2147450879, %v310
      %v319 = vand.u32 2147450879, %v311
      %v320 = vand.u32 2147450879, %v312
      %v321 = vand.u32 2147450879, %v313
      %v322 = vand.u32 2147450879, %v314
      %v331 = vunpack.c.l.b16 %v299
      %v332 = vunpack.c.h.b16 %v299
      %v333 = vunpack.c.l.b16 %v300
      %v334 = vunpack.c.h.b16 %v300
      %v335 = vunpack.c.l.b16 %v301
      %v336 = vunpack.c.h.b16 %v301
      %v337 = vunpack.c.l.b16 %v302
      %v338 = vunpack.c.h.b16 %v302
      %v339 = vunpack.c.l.b16 %v303
      %v340 = vunpack.c.h.b16 %v303
      %v341 = vunpack.c.l.b16 %v304
      %v342 = vunpack.c.h.b16 %v304
      %v343 = vunpack.c.l.b16 %v305
      %v344 = vunpack.c.h.b16 %v305
      %v345 = vunpack.c.l.b16 %v306
      %v346 = vunpack.c.h.b16 %v306
      %v347 = vpack.c.b16 %v339, %v331
      %v348 = vpack.c.b16 %v340, %v332
      %v349 = vpack.c.b16 %v341, %v333
      %v350 = vpack.c.b16 %v342, %v334
      %v351 = vpack.c.b16 %v343, %v335
      %v352 = vpack.c.b16 %v344, %v336
      %v353 = vpack.c.b16 %v345, %v337
      %v354 = vpack.c.b16 %v346, %v338
      %v371 = vunpack.c.l.b16 %v315
      %v372 = vunpack.c.h.b16 %v315
      %v373 = vunpack.c.l.b16 %v316
      %v374 = vunpack.c.h.b16 %v316
      %v375 = vunpack.c.l.b16 %v317
      %v376 = vunpack.c.h.b16 %v317
      %v377 = vunpack.c.l.b16 %v318
      %v378 = vunpack.c.h.b16 %v318
      %v379 = vunpack.c.l.b16 %v319
      %v380 = vunpack.c.h.b16 %v319
      %v381 = vunpack.c.l.b16 %v320
      %v382 = vunpack.c.h.b16 %v320
      %v383 = vunpack.c.l.b16 %v321
      %v384 = vunpack.c.h.b16 %v321
      %v385 = vunpack.c.l.b16 %v322
      %v386 = vunpack.c.h.b16 %v322
      %v387 = vpack.c.b16 %v379, %v371
      %v388 = vpack.c.b16 %v380, %v372
      %v389 = vpack.c.b16 %v381, %v373
      %v390 = vpack.c.b16 %v382, %v374
      %v391 = vpack.c.b16 %v383, %v375
      %v392 = vpack.c.b16 %v384, %v376
      %v393 = vpack.c.b16 %v385, %v377
      %v394 = vpack.c.b16 %v386, %v378
      %v403 = vld [vmem:[%s1] sm:$0xf]
      %v404 = vld [vmem:[%s1 + $0x4] sm:$0xf]
      %v405 = vld [vmem:[%s2] sm:$0xf]
      %v406 = vld [vmem:[%s2 + $0x4] sm:$0xf]
      %v409 = vunpack.c.l.b16 %v405
      %v410 = vunpack.c.l.b16 %v406
      %v411 = vpack.c.b16 %v410, %v409
      %vm412 = vcmask 261120
      %v414 = vsel %vm412, %v411, 0
      %416 = vmatprep.subr.bf16.mxu0 %v348
      %417 = vmatpush1.bf16.msra.mxu0 %v347
      %418 = vmatprep.subr.bf16.mxu0 %v388
      %419 = vmatpush1.bf16.msra.mxu0 %v387
      %420 = vmatprep.subr.bf16.mxu0 0
      %421 = vmatpush1.bf16.msra.mxu0 0
      %422 = vmatprep.subr.bf16.mxu0 0
      %423 = vmatpush1.bf16.msra.mxu0 0
      %424 = vmatprep.subr.bf16.mxu0 0
      %425 = vmatpush1.bf16.msra.mxu0 0
      %426 = vmatprep.subr.bf16.mxu0 0
      %427 = vmatpush1.bf16.msra.mxu0 0
      %428 = vmatprep.subr.bf16.mxu0 0
      %429 = vmatpush1.bf16.msra.mxu0 0
      %430 = vmatprep.subr.bf16.mxu0 0
      %431 = vmatpush1.bf16.msra.mxu0 0
      %432 = vmatprep.subr.bf16.mxu0 0
      %433 = vmatpush1.bf16.msra.mxu0 0
      %434 = vmatprep.subr.bf16.mxu0 0
      %435 = vmatpush1.bf16.msra.mxu0 0
      %436 = vmatprep.subr.bf16.mxu0 0
      %437 = vmatpush1.bf16.msra.mxu0 0
      %438 = vmatprep.subr.bf16.mxu0 0
      %439 = vmatpush1.bf16.msra.mxu0 0
      %440 = vmatprep.subr.bf16.mxu0 0
      %441 = vmatpush1.bf16.msra.mxu0 0
      %442 = vmatprep.subr.bf16.mxu0 0
      %443 = vmatpush1.bf16.msra.mxu0 0
      %444 = vmatprep.subr.bf16.mxu0 0
      %445 = vmatpush1.bf16.msra.mxu0 0
      %446 = vmatprep.subr.bf16.mxu0 0
      %447 = vmatpush1.bf16.msra.mxu0 0
      %448 = vmatprep.mubr.bf16.mxu0 0
      %449 = vmatmul.mubr.bf16.gmra.mrb[0].mxu0 %v414
      %v450 = vpop.f32.mrb[0].mxu0
      %v451 = vadd.f32 0.0, %v450
      %v452 = vpop.f32.mrb[0].mxu0
      %v453 = vadd.f32 0.0, %v452
      %v454 = vpop.f32.mrb[0].mxu0
      %v455 = vadd.f32 0.0, %v454
      %v456 = vpop.f32.mrb[0].mxu0
      %v457 = vadd.f32 0.0, %v456
      %458 = vdwg.mxu0
      %459 = vmatprep.subr.bf16.mxu0 %v350
      %460 = vmatpush1.bf16.msra.mxu0 %v349
      %461 = vmatprep.subr.bf16.mxu0 %v390
      %462 = vmatpush1.bf16.msra.mxu0 %v389
      %463 = vmatprep.subr.bf16.mxu0 0
      %464 = vmatpush1.bf16.msra.mxu0 0
      %465 = vmatprep.subr.bf16.mxu0 0
      %466 = vmatpush1.bf16.msra.mxu0 0
      %467 = vmatprep.subr.bf16.mxu0 0
      %468 = vmatpush1.bf16.msra.mxu0 0
      %469 = vmatprep.subr.bf16.mxu0 0
      %470 = vmatpush1.bf16.msra.mxu0 0
      %471 = vmatprep.subr.bf16.mxu0 0
      %472 = vmatpush1.bf16.msra.mxu0 0
      %473 = vmatprep.subr.bf16.mxu0 0
      %474 = vmatpush1.bf16.msra.mxu0 0
      %475 = vmatprep.subr.bf16.mxu0 0
      %476 = vmatpush1.bf16.msra.mxu0 0
      %477 = vmatprep.subr.bf16.mxu0 0
      %478 = vmatpush1.bf16.msra.mxu0 0
      %479 = vmatprep.subr.bf16.mxu0 0
      %480 = vmatpush1.bf16.msra.mxu0 0
      %481 = vmatprep.subr.bf16.mxu0 0
      %482 = vmatpush1.bf16.msra.mxu0 0
      %483 = vmatprep.subr.bf16.mxu0 0
      %484 = vmatpush1.bf16.msra.mxu0 0
      %485 = vmatprep.subr.bf16.mxu0 0
      %486 = vmatpush1.bf16.msra.mxu0 0
      %487 = vmatprep.subr.bf16.mxu0 0
      %488 = vmatpush1.bf16.msra.mxu0 0
      %489 = vmatprep.subr.bf16.mxu0 0
      %490 = vmatpush1.bf16.msra.mxu0 0
      %491 = vmatprep.mubr.bf16.mxu0 0
      %492 = vmatmul.mubr.bf16.gmra.mrb[0].mxu0 %v414
      %v493 = vpop.f32.mrb[0].mxu0
      %v494 = vadd.f32 0.0, %v493
      %v495 = vpop.f32.mrb[0].mxu0
      %v496 = vadd.f32 0.0, %v495
      %v497 = vpop.f32.mrb[0].mxu0
      %v498 = vadd.f32 0.0, %v497
      %v499 = vpop.f32.mrb[0].mxu0
      %v500 = vadd.f32 0.0, %v499
      %501 = vdwg.mxu0
      %502 = vmatprep.subr.bf16.mxu0 %v352
      %503 = vmatpush1.bf16.msra.mxu0 %v351
      %504 = vmatprep.subr.bf16.mxu0 %v392
      %505 = vmatpush1.bf16.msra.mxu0 %v391
      %506 = vmatprep.subr.bf16.mxu0 0
      %507 = vmatpush1.bf16.msra.mxu0 0
      %508 = vmatprep.subr.bf16.mxu0 0
      %509 = vmatpush1.bf16.msra.mxu0 0
      %510 = vmatprep.subr.bf16.mxu0 0
      %511 = vmatpush1.bf16.msra.mxu0 0
      %512 = vmatprep.subr.bf16.mxu0 0
      %513 = vmatpush1.bf16.msra.mxu0 0
      %514 = vmatprep.subr.bf16.mxu0 0
      %515 = vmatpush1.bf16.msra.mxu0 0
      %516 = vmatprep.subr.bf16.mxu0 0
      %517 = vmatpush1.bf16.msra.mxu0 0
      %518 = vmatprep.subr.bf16.mxu0 0
      %519 = vmatpush1.bf16.msra.mxu0 0
      %520 = vmatprep.subr.bf16.mxu0 0
      %521 = vmatpush1.bf16.msra.mxu0 0
      %522 = vmatprep.subr.bf16.mxu0 0
      %523 = vmatpush1.bf16.msra.mxu0 0
      %524 = vmatprep.subr.bf16.mxu0 0
      %525 = vmatpush1.bf16.msra.mxu0 0
      %526 = vmatprep.subr.bf16.mxu0 0
      %527 = vmatpush1.bf16.msra.mxu0 0
      %528 = vmatprep.subr.bf16.mxu0 0
      %529 = vmatpush1.bf16.msra.mxu0 0
      %530 = vmatprep.subr.bf16.mxu0 0
      %531 = vmatpush1.bf16.msra.mxu0 0
      %532 = vmatprep.subr.bf16.mxu0 0
      %533 = vmatpush1.bf16.msra.mxu0 0
      %534 = vmatprep.mubr.bf16.mxu0 0
      %535 = vmatmul.mubr.bf16.gmra.mrb[0].mxu0 %v414
      %v536 = vpop.f32.mrb[0].mxu0
      %v537 = vadd.f32 0.0, %v536
      %v538 = vpop.f32.mrb[0].mxu0
      %v539 = vadd.f32 0.0, %v538
      %v540 = vpop.f32.mrb[0].mxu0
      %v541 = vadd.f32 0.0, %v540
      %v542 = vpop.f32.mrb[0].mxu0
      %v543 = vadd.f32 0.0, %v542
      %544 = vdwg.mxu0
      %545 = vmatprep.subr.bf16.mxu0 %v354
      %546 = vmatpush1.bf16.msra.mxu0 %v353
      %547 = vmatprep.subr.bf16.mxu0 %v394
      %548 = vmatpush1.bf16.msra.mxu0 %v393
      %549 = vmatprep.subr.bf16.mxu0 0
      %550 = vmatpush1.bf16.msra.mxu0 0
      %551 = vmatprep.subr.bf16.mxu0 0
      %552 = vmatpush1.bf16.msra.mxu0 0
      %553 = vmatprep.subr.bf16.mxu0 0
      %554 = vmatpush1.bf16.msra.mxu0 0
      %555 = vmatprep.subr.bf16.mxu0 0
      %556 = vmatpush1.bf16.msra.mxu0 0
      %557 = vmatprep.subr.bf16.mxu0 0
      %558 = vmatpush1.bf16.msra.mxu0 0
      %559 = vmatprep.subr.bf16.mxu0 0
      %560 = vmatpush1.bf16.msra.mxu0 0
      %561 = vmatprep.subr.bf16.mxu0 0
      %562 = vmatpush1.bf16.msra.mxu0 0
      %563 = vmatprep.subr.bf16.mxu0 0
      %564 = vmatpush1.bf16.msra.mxu0 0
      %565 = vmatprep.subr.bf16.mxu0 0
      %566 = vmatpush1.bf16.msra.mxu0 0
      %567 = vmatprep.subr.bf16.mxu0 0
      %568 = vmatpush1.bf16.msra.mxu0 0
      %569 = vmatprep.subr.bf16.mxu0 0
      %570 = vmatpush1.bf16.msra.mxu0 0
      %571 = vmatprep.subr.bf16.mxu0 0
      %572 = vmatpush1.bf16.msra.mxu0 0
      %573 = vmatprep.subr.bf16.mxu0 0
      %574 = vmatpush1.bf16.msra.mxu0 0
      %575 = vmatprep.subr.bf16.mxu0 0
      %576 = vmatpush1.bf16.msra.mxu0 0
      %577 = vmatprep.mubr.bf16.mxu0 0
      %578 = vmatmul.mubr.bf16.gmra.mrb[0].mxu0 %v414
      %v579 = vpop.f32.mrb[0].mxu0
      %v580 = vadd.f32 0.0, %v579
      %v581 = vpop.f32.mrb[0].mxu0
      %v582 = vadd.f32 0.0, %v581
      %v583 = vpop.f32.mrb[0].mxu0
      %v584 = vadd.f32 0.0, %v583
      %v585 = vpop.f32.mrb[0].mxu0
      %v586 = vadd.f32 0.0, %v585
      %587 = vdwg.mxu0
      %v590 = vunpack.c.l.b16 %v403
      %v591 = vunpack.c.l.b16 %v404
      %v592 = vpack.c.b16 %v591, %v590
      %v633 = vunpack.c.l.b16 %v251
      %v634 = vunpack.c.h.b16 %v251
      %v635 = vunpack.c.l.b16 %v252
      %v636 = vunpack.c.h.b16 %v252
      %v637 = vunpack.c.l.b16 %v253
      %v638 = vunpack.c.h.b16 %v253
      %v639 = vunpack.c.l.b16 %v254
      %v640 = vunpack.c.h.b16 %v254
      %v641 = vunpack.c.l.b16 %v255
      %v642 = vunpack.c.h.b16 %v255
      %v643 = vunpack.c.l.b16 %v256
      %v644 = vunpack.c.h.b16 %v256
      %v645 = vunpack.c.l.b16 %v257
      %v646 = vunpack.c.h.b16 %v257
      %v647 = vunpack.c.l.b16 %v258
      %v648 = vunpack.c.h.b16 %v258
      %v649 = vunpack.c.l.b16 %v259
      %v650 = vunpack.c.h.b16 %v259
      %v651 = vunpack.c.l.b16 %v260
      %v652 = vunpack.c.h.b16 %v260
      %v653 = vunpack.c.l.b16 %v261
      %v654 = vunpack.c.h.b16 %v261
      %v655 = vunpack.c.l.b16 %v262
      %v656 = vunpack.c.h.b16 %v262
      %v657 = vunpack.c.l.b16 %v263
      %v658 = vunpack.c.h.b16 %v263
      %v659 = vunpack.c.l.b16 %v264
      %v660 = vunpack.c.h.b16 %v264
      %v661 = vunpack.c.l.b16 %v265
      %v662 = vunpack.c.h.b16 %v265
      %v663 = vunpack.c.l.b16 %v266
      %v664 = vunpack.c.h.b16 %v266
      %v665 = vunpack.c.l.b16 %v267
      %v666 = vunpack.c.h.b16 %v267
      %v667 = vunpack.c.l.b16 %v268
      %v668 = vunpack.c.h.b16 %v268
      %v669 = vunpack.c.l.b16 %v269
      %v670 = vunpack.c.h.b16 %v269
      %v671 = vunpack.c.l.b16 %v270
      %v672 = vunpack.c.h.b16 %v270
      %v673 = vunpack.c.l.b16 %v271
      %v674 = vunpack.c.h.b16 %v271
      %v675 = vunpack.c.l.b16 %v272
      %v676 = vunpack.c.h.b16 %v272
      %v677 = vunpack.c.l.b16 %v273
      %v678 = vunpack.c.h.b16 %v273
      %v679 = vunpack.c.l.b16 %v274
      %v680 = vunpack.c.h.b16 %v274
      %v681 = vunpack.c.l.b16 %v275
      %v682 = vunpack.c.h.b16 %v275
      %v683 = vunpack.c.l.b16 %v276
      %v684 = vunpack.c.h.b16 %v276
      %v685 = vunpack.c.l.b16 %v277
      %v686 = vunpack.c.h.b16 %v277
      %v687 = vunpack.c.l.b16 %v278
      %v688 = vunpack.c.h.b16 %v278
      %v689 = vunpack.c.l.b16 %v279
      %v690 = vunpack.c.h.b16 %v279
      %v691 = vunpack.c.l.b16 %v280
      %v692 = vunpack.c.h.b16 %v280
      %v693 = vunpack.c.l.b16 %v281
      %v694 = vunpack.c.h.b16 %v281
      %v695 = vunpack.c.l.b16 %v282
      %v696 = vunpack.c.h.b16 %v282
      %v697 = vunpack.c.l.b16 %v283
      %v698 = vunpack.c.h.b16 %v283
      %v699 = vunpack.c.l.b16 %v284
      %v700 = vunpack.c.h.b16 %v284
      %v701 = vunpack.c.l.b16 %v285
      %v702 = vunpack.c.h.b16 %v285
      %v703 = vunpack.c.l.b16 %v286
      %v704 = vunpack.c.h.b16 %v286
      %v705 = vunpack.c.l.b16 %v287
      %v706 = vunpack.c.h.b16 %v287
      %v707 = vunpack.c.l.b16 %v288
      %v708 = vunpack.c.h.b16 %v288
      %v709 = vunpack.c.l.b16 %v289
      %v710 = vunpack.c.h.b16 %v289
      %v711 = vunpack.c.l.b16 %v290
      %v712 = vunpack.c.h.b16 %v290
      %v713 = vpack.c.b16 %v641, %v633
      %v714 = vpack.c.b16 %v642, %v634
      %v715 = vpack.c.b16 %v643, %v635
      %v716 = vpack.c.b16 %v644, %v636
      %v717 = vpack.c.b16 %v645, %v637
      %v718 = vpack.c.b16 %v646, %v638
      %v719 = vpack.c.b16 %v647, %v639
      %v720 = vpack.c.b16 %v648, %v640
      %v721 = vpack.c.b16 %v657, %v649
      %v722 = vpack.c.b16 %v658, %v650
      %v723 = vpack.c.b16 %v659, %v651
      %v724 = vpack.c.b16 %v660, %v652
      %v725 = vpack.c.b16 %v661, %v653
      %v726 = vpack.c.b16 %v662, %v654
      %v727 = vpack.c.b16 %v663, %v655
      %v728 = vpack.c.b16 %v664, %v656
      %v729 = vpack.c.b16 %v673, %v665
      %v730 = vpack.c.b16 %v674, %v666
      %v731 = vpack.c.b16 %v675, %v667
      %v732 = vpack.c.b16 %v676, %v668
      %v733 = vpack.c.b16 %v677, %v669
      %v734 = vpack.c.b16 %v678, %v670
      %v735 = vpack.c.b16 %v679, %v671
      %v736 = vpack.c.b16 %v680, %v672
      %v737 = vpack.c.b16 %v689, %v681
      %v738 = vpack.c.b16 %v690, %v682
      %v739 = vpack.c.b16 %v691, %v683
      %v740 = vpack.c.b16 %v692, %v684
      %v741 = vpack.c.b16 %v693, %v685
      %v742 = vpack.c.b16 %v694, %v686
      %v743 = vpack.c.b16 %v695, %v687
      %v744 = vpack.c.b16 %v696, %v688
      %v745 = vpack.c.b16 %v705, %v697
      %v746 = vpack.c.b16 %v706, %v698
      %v747 = vpack.c.b16 %v707, %v699
      %v748 = vpack.c.b16 %v708, %v700
      %v749 = vpack.c.b16 %v709, %v701
      %v750 = vpack.c.b16 %v710, %v702
      %v751 = vpack.c.b16 %v711, %v703
      %v752 = vpack.c.b16 %v712, %v704
      %vm793 = vcmask 654336
      %v795 = vsel %vm793, %v592, 0
      %797 = vmatprep.subr.bf16.mxu0 %v714
      %798 = vmatpush1.bf16.msra.mxu0 %v713
      %799 = vmatprep.subr.bf16.mxu0 %v722
      %800 = vmatpush1.bf16.msra.mxu0 %v721
      %801 = vmatprep.subr.bf16.mxu0 %v730
      %802 = vmatpush1.bf16.msra.mxu0 %v729
      %803 = vmatprep.subr.bf16.mxu0 %v738
      %804 = vmatpush1.bf16.msra.mxu0 %v737
      %805 = vmatprep.subr.bf16.mxu0 %v746
      %806 = vmatpush1.bf16.msra.mxu0 %v745
      %807 = vmatprep.subr.bf16.mxu0 0
      %808 = vmatpush1.bf16.msra.mxu0 0
      %809 = vmatprep.subr.bf16.mxu0 0
      %810 = vmatpush1.bf16.msra.mxu0 0
      %811 = vmatprep.subr.bf16.mxu0 0
      %812 = vmatpush1.bf16.msra.mxu0 0
      %813 = vmatprep.subr.bf16.mxu0 0
      %814 = vmatpush1.bf16.msra.mxu0 0
      %815 = vmatprep.subr.bf16.mxu0 0
      %816 = vmatpush1.bf16.msra.mxu0 0
      %817 = vmatprep.subr.bf16.mxu0 0
      %818 = vmatpush1.bf16.msra.mxu0 0
      %819 = vmatprep.subr.bf16.mxu0 0
      %820 = vmatpush1.bf16.msra.mxu0 0
      %821 = vmatprep.subr.bf16.mxu0 0
      %822 = vmatpush1.bf16.msra.mxu0 0
      %823 = vmatprep.subr.bf16.mxu0 0
      %824 = vmatpush1.bf16.msra.mxu0 0
      %825 = vmatprep.subr.bf16.mxu0 0
      %826 = vmatpush1.bf16.msra.mxu0 0
      %827 = vmatprep.subr.bf16.mxu0 0
      %828 = vmatpush1.bf16.msra.mxu0 0
      %829 = vmatprep.mubr.bf16.mxu0 0
      %830 = vmatmul.mubr.bf16.gmra.mrb[0].mxu0 %v795
      %v831 = vpop.f32.mrb[0].mxu0
      %v832 = vadd.f32 %v451, %v831
      %v833 = vpop.f32.mrb[0].mxu0
      %v834 = vadd.f32 %v453, %v833
      %v835 = vpop.f32.mrb[0].mxu0
      %v836 = vadd.f32 %v455, %v835
      %v837 = vpop.f32.mrb[0].mxu0
      %v838 = vadd.f32 %v457, %v837
      %839 = vdwg.mxu0
      %840 = vmatprep.subr.bf16.mxu0 %v716
      %841 = vmatpush1.bf16.msra.mxu0 %v715
      %842 = vmatprep.subr.bf16.mxu0 %v724
      %843 = vmatpush1.bf16.msra.mxu0 %v723
      %844 = vmatprep.subr.bf16.mxu0 %v732
      %845 = vmatpush1.bf16.msra.mxu0 %v731
      %846 = vmatprep.subr.bf16.mxu0 %v740
      %847 = vmatpush1.bf16.msra.mxu0 %v739
      %848 = vmatprep.subr.bf16.mxu0 %v748
      %849 = vmatpush1.bf16.msra.mxu0 %v747
      %850 = vmatprep.subr.bf16.mxu0 0
      %851 = vmatpush1.bf16.msra.mxu0 0
      %852 = vmatprep.subr.bf16.mxu0 0
      %853 = vmatpush1.bf16.msra.mxu0 0
      %854 = vmatprep.subr.bf16.mxu0 0
      %855 = vmatpush1.bf16.msra.mxu0 0
      %856 = vmatprep.subr.bf16.mxu0 0
      %857 = vmatpush1.bf16.msra.mxu0 0
      %858 = vmatprep.subr.bf16.mxu0 0
      %859 = vmatpush1.bf16.msra.mxu0 0
      %860 = vmatprep.subr.bf16.mxu0 0
      %861 = vmatpush1.bf16.msra.mxu0 0
      %862 = vmatprep.subr.bf16.mxu0 0
      %863 = vmatpush1.bf16.msra.mxu0 0
      %864 = vmatprep.subr.bf16.mxu0 0
      %865 = vmatpush1.bf16.msra.mxu0 0
      %866 = vmatprep.subr.bf16.mxu0 0
      %867 = vmatpush1.bf16.msra.mxu0 0
      %868 = vmatprep.subr.bf16.mxu0 0
      %869 = vmatpush1.bf16.msra.mxu0 0
      %870 = vmatprep.subr.bf16.mxu0 0
      %871 = vmatpush1.bf16.msra.mxu0 0
      %872 = vmatprep.mubr.bf16.mxu0 0
      %873 = vmatmul.mubr.bf16.gmra.mrb[0].mxu0 %v795
      %v874 = vpop.f32.mrb[0].mxu0
      %v875 = vadd.f32 %v494, %v874
      %v876 = vpop.f32.mrb[0].mxu0
      %v877 = vadd.f32 %v496, %v876
      %v878 = vpop.f32.mrb[0].mxu0
      %v879 = vadd.f32 %v498, %v878
      %v880 = vpop.f32.mrb[0].mxu0
      %v881 = vadd.f32 %v500, %v880
      %882 = vdwg.mxu0
      %883 = vmatprep.subr.bf16.mxu0 %v718
      %884 = vmatpush1.bf16.msra.mxu0 %v717
      %885 = vmatprep.subr.bf16.mxu0 %v726
      %886 = vmatpush1.bf16.msra.mxu0 %v725
      %887 = vmatprep.subr.bf16.mxu0 %v734
      %888 = vmatpush1.bf16.msra.mxu0 %v733
      %889 = vmatprep.subr.bf16.mxu0 %v742
      %890 = vmatpush1.bf16.msra.mxu0 %v741
      %891 = vmatprep.subr.bf16.mxu0 %v750
      %892 = vmatpush1.bf16.msra.mxu0 %v749
      %893 = vmatprep.subr.bf16.mxu0 0
      %894 = vmatpush1.bf16.msra.mxu0 0
      %895 = vmatprep.subr.bf16.mxu0 0
      %896 = vmatpush1.bf16.msra.mxu0 0
      %897 = vmatprep.subr.bf16.mxu0 0
      %898 = vmatpush1.bf16.msra.mxu0 0
      %899 = vmatprep.subr.bf16.mxu0 0
      %900 = vmatpush1.bf16.msra.mxu0 0
      %901 = vmatprep.subr.bf16.mxu0 0
      %902 = vmatpush1.bf16.msra.mxu0 0
      %903 = vmatprep.subr.bf16.mxu0 0
      %904 = vmatpush1.bf16.msra.mxu0 0
      %905 = vmatprep.subr.bf16.mxu0 0
      %906 = vmatpush1.bf16.msra.mxu0 0
      %907 = vmatprep.subr.bf16.mxu0 0
      %908 = vmatpush1.bf16.msra.mxu0 0
      %909 = vmatprep.subr.bf16.mxu0 0
      %910 = vmatpush1.bf16.msra.mxu0 0
      %911 = vmatprep.subr.bf16.mxu0 0
      %912 = vmatpush1.bf16.msra.mxu0 0
      %913 = vmatprep.subr.bf16.mxu0 0
      %914 = vmatpush1.bf16.msra.mxu0 0
      %915 = vmatprep.mubr.bf16.mxu0 0
      %916 = vmatmul.mubr.bf16.gmra.mrb[0].mxu0 %v795
      %v917 = vpop.f32.mrb[0].mxu0
      %v918 = vadd.f32 %v537, %v917
      %v919 = vpop.f32.mrb[0].mxu0
      %v920 = vadd.f32 %v539, %v919
      %v921 = vpop.f32.mrb[0].mxu0
      %v922 = vadd.f32 %v541, %v921
      %v923 = vpop.f32.mrb[0].mxu0
      %v924 = vadd.f32 %v543, %v923
      %925 = vdwg.mxu0
      %926 = vmatprep.subr.bf16.mxu0 %v720
      %927 = vmatpush1.bf16.msra.mxu0 %v719
      %928 = vmatprep.subr.bf16.mxu0 %v728
      %929 = vmatpush1.bf16.msra.mxu0 %v727
      %930 = vmatprep.subr.bf16.mxu0 %v736
      %931 = vmatpush1.bf16.msra.mxu0 %v735
      %932 = vmatprep.subr.bf16.mxu0 %v744
      %933 = vmatpush1.bf16.msra.mxu0 %v743
      %934 = vmatprep.subr.bf16.mxu0 %v752
      %935 = vmatpush1.bf16.msra.mxu0 %v751
      %936 = vmatprep.subr.bf16.mxu0 0
      %937 = vmatpush1.bf16.msra.mxu0 0
      %938 = vmatprep.subr.bf16.mxu0 0
      %939 = vmatpush1.bf16.msra.mxu0 0
      %940 = vmatprep.subr.bf16.mxu0 0
      %941 = vmatpush1.bf16.msra.mxu0 0
      %942 = vmatprep.subr.bf16.mxu0 0
      %943 = vmatpush1.bf16.msra.mxu0 0
      %944 = vmatprep.subr.bf16.mxu0 0
      %945 = vmatpush1.bf16.msra.mxu0 0
      %946 = vmatprep.subr.bf16.mxu0 0
      %947 = vmatpush1.bf16.msra.mxu0 0
      %948 = vmatprep.subr.bf16.mxu0 0
      %949 = vmatpush1.bf16.msra.mxu0 0
      %950 = vmatprep.subr.bf16.mxu0 0
      %951 = vmatpush1.bf16.msra.mxu0 0
      %952 = vmatprep.subr.bf16.mxu0 0
      %953 = vmatpush1.bf16.msra.mxu0 0
      %954 = vmatprep.subr.bf16.mxu0 0
      %955 = vmatpush1.bf16.msra.mxu0 0
      %956 = vmatprep.subr.bf16.mxu0 0
      %957 = vmatpush1.bf16.msra.mxu0 0
      %958 = vmatprep.mubr.bf16.mxu0 0
      %959 = vmatmul.mubr.bf16.gmra.mrb[0].mxu0 %v795
      %v960 = vpop.f32.mrb[0].mxu0
      %v961 = vadd.f32 %v580, %v960
      %v962 = vpop.f32.mrb[0].mxu0
      %v963 = vadd.f32 %v582, %v962
      %v964 = vpop.f32.mrb[0].mxu0
      %v965 = vadd.f32 %v584, %v964
      %v966 = vpop.f32.mrb[0].mxu0
      %v967 = vadd.f32 %v586, %v966
      %968 = vdwg.mxu0
      %v969 = vpack.c.bf16 %v836, %v832
      %v970 = vpack.c.bf16 %v838, %v834
      %v971 = vpack.c.bf16 %v879, %v875
      %v972 = vpack.c.bf16 %v881, %v877
      %v973 = vpack.c.bf16 %v922, %v918
      %v974 = vpack.c.bf16 %v924, %v920
      %v975 = vpack.c.bf16 %v965, %v961
      %v976 = vpack.c.bf16 %v967, %v963
      %v985 = vunpack.c.l.b16 %v969
      %v986 = vunpack.c.l.b16 %v970
      %v987 = vunpack.c.l.b16 %v971
      %v988 = vunpack.c.l.b16 %v972
      %v989 = vunpack.c.l.b16 %v973
      %v990 = vunpack.c.l.b16 %v974
      %v991 = vunpack.c.l.b16 %v975
      %v992 = vunpack.c.l.b16 %v976
      %v993 = vunpack.c.h.b16 %v969
      %v994 = vunpack.c.h.b16 %v970
      %v995 = vunpack.c.h.b16 %v971
      %v996 = vunpack.c.h.b16 %v972
      %v997 = vunpack.c.h.b16 %v973
      %v998 = vunpack.c.h.b16 %v974
      %v999 = vunpack.c.h.b16 %v975
      %v1000 = vunpack.c.h.b16 %v976
      %v1001 = vpack.c.b16 %v986, %v985
      %v1002 = vpack.c.b16 %v988, %v987
      %v1003 = vpack.c.b16 %v990, %v989
      %v1004 = vpack.c.b16 %v992, %v991
      %v1005 = vpack.c.b16 %v994, %v993
      %v1006 = vpack.c.b16 %v996, %v995
      %v1007 = vpack.c.b16 %v998, %v997
      %v1008 = vpack.c.b16 %v1000, %v999
      %1017 = vst [vmem:[%s243] sm:$0xff] %v1001
      %1018 = vst [vmem:[%s243 + $0x8] sm:$0xff] %v1002
      %1019 = vst [vmem:[%s243 + $0x10] sm:$0xff] %v1003
      %1020 = vst [vmem:[%s243 + $0x18] sm:$0xff] %v1004
      %1021 = vst [vmem:[%s243 + $0x20] sm:$0xff] %v1005
      %1022 = vst [vmem:[%s243 + $0x28] sm:$0xff] %v1006
      %1023 = vst [vmem:[%s243 + $0x30] sm:$0xff] %v1007
      %1024 = vst [vmem:[%s243 + $0x38] sm:$0xff] %v1008
      %v1025 = vmax.f32 %v832, 0.0
      %v1026 = vmax.f32 %v834, 0.0
      %v1027 = vmax.f32 %v875, 0.0
      %v1028 = vmax.f32 %v877, 0.0
      %v1029 = vmax.f32 %v918, 0.0
      %v1030 = vmax.f32 %v920, 0.0
      %v1031 = vmax.f32 %v961, 0.0
      %v1032 = vmax.f32 %v963, 0.0
      %v1033 = vmax.f32 %v836, 0.0
      %v1034 = vmax.f32 %v838, 0.0
      %v1035 = vmax.f32 %v879, 0.0
      %v1036 = vmax.f32 %v881, 0.0
      %v1037 = vmax.f32 %v922, 0.0
      %v1038 = vmax.f32 %v924, 0.0
      %v1039 = vmax.f32 %v965, 0.0
      %v1040 = vmax.f32 %v967, 0.0
      %v1041 = vadd.f32 %v1025, %v1026
      %v1042 = vadd.f32 %v1041, %v1027
      %v1043 = vadd.f32 %v1042, %v1028
      %v1044 = vadd.f32 %v1043, %v1029
      %v1045 = vadd.f32 %v1044, %v1030
      %v1046 = vadd.f32 %v1045, %v1031
      %v1047 = vadd.f32 %v1046, %v1032
      %1048 = vadd.xlane.f32.xlu0 %v1047
      %v1049 = vpop.xlane.xlu0 %1048
      %v1050 = vadd.f32 %v1033, %v1034
      %v1051 = vadd.f32 %v1050, %v1035
      %v1052 = vadd.f32 %v1051, %v1036
      %v1053 = vadd.f32 %v1052, %v1037
      %v1054 = vadd.f32 %v1053, %v1038
      %v1055 = vadd.f32 %v1054, %v1039
      %v1056 = vadd.f32 %v1055, %v1040
      %1057 = vadd.xlane.f32.xlu0 %v1056
      %v1058 = vpop.xlane.xlu0 %1057
      %v1059 = vmul.f32 %v1025, %v1025
      %v1060 = vmul.f32 %v1026, %v1026
      %v1061 = vmul.f32 %v1027, %v1027
      %v1062 = vmul.f32 %v1028, %v1028
      %v1063 = vmul.f32 %v1029, %v1029
      %v1064 = vmul.f32 %v1030, %v1030
      %v1065 = vmul.f32 %v1031, %v1031
      %v1066 = vmul.f32 %v1032, %v1032
      %v1067 = vmul.f32 %v1033, %v1033
      %v1068 = vmul.f32 %v1034, %v1034
      %v1069 = vmul.f32 %v1035, %v1035
      %v1070 = vmul.f32 %v1036, %v1036
      %v1071 = vmul.f32 %v1037, %v1037
      %v1072 = vmul.f32 %v1038, %v1038
      %v1073 = vmul.f32 %v1039, %v1039
      %v1074 = vmul.f32 %v1040, %v1040
      %v1075 = vadd.f32 %v1059, %v1060
      %v1076 = vadd.f32 %v1075, %v1061
      %v1077 = vadd.f32 %v1076, %v1062
      %v1078 = vadd.f32 %v1077, %v1063
      %v1079 = vadd.f32 %v1078, %v1064
      %v1080 = vadd.f32 %v1079, %v1065
      %v1081 = vadd.f32 %v1080, %v1066
      %1082 = vadd.xlane.f32.xlu0 %v1081
      %v1083 = vpop.xlane.xlu0 %1082
      %v1084 = vadd.f32 %v1067, %v1068
      %v1085 = vadd.f32 %v1084, %v1069
      %v1086 = vadd.f32 %v1085, %v1070
      %v1087 = vadd.f32 %v1086, %v1071
      %v1088 = vadd.f32 %v1087, %v1072
      %v1089 = vadd.f32 %v1088, %v1073
      %v1090 = vadd.f32 %v1089, %v1074
      %1091 = vadd.xlane.f32.xlu0 %v1090
      %v1092 = vpop.xlane.xlu0 %1091
      %vm1093 = vcmask 7168
      %v1094 = vsel %vm1093, %v1049, %v1083
      %v1095 = vsel %vm1093, %v1058, %v1092
      %p1096 = scmp.eq.s32.totalorder %s21, 0
      // Predicated region
      $region33: #{mres_conv_forward.2} parent=31 // pred_check
        %p1097 = pneg %p1096
      $region34: #{mres_conv_forward.2} parent=31 // pred_check_branch
        %1099 = sbr.rel (%p1097) target = $region36
      $region35: #{mres_conv_forward.2} parent=31 // pred_region
        %vm1100 = vcmask 15360
        %1101 = vst.msk [vmem:[#allocation2] sm:$0xff] %vm1100, 0.0
        %1102 = vst.msk [vmem:[#allocation2 + $0x8] sm:$0xff] %vm1100, 0.0
      $region36: #{mres_conv_forward.2} parent=31 // pred_fallthru
        _
      %v1103 = vld [vmem:[#allocation2] sm:$0xff]
      %v1104 = vld [vmem:[#allocation2 + $0x8] sm:$0xff]
      %v1105 = vadd.f32 %v1103, %v1094
      %v1106 = vadd.f32 %v1104, %v1095
      %vm1107 = vcmask 15360
      %1108 = vst.msk [vmem:[#allocation2] sm:$0xff] %vm1107, %v1105
      %1109 = vst.msk [vmem:[#allocation2 + $0x8] sm:$0xff] %vm1107, %v1106
      // Predicated region
      $region37: #{mres_conv_forward.2} parent=31 // pred_check
        %p1110 = pneg %p1096
      $region38: #{mres_conv_forward.2} parent=31 // pred_check_branch
        %1112 = sbr.rel (%p1110) target = $region40
      $region39: #{mres_conv_forward.2} parent=31 // pred_region
        %v1113 = vld [vmem:[#allocation2] sm:$0xff]
        %v1114 = vld [vmem:[#allocation2 + $0x8] sm:$0xff]
        %1115 = vst.msk [vmem:[%s249] sm:$0xff] %vm1107, %v1113
        %1116 = vst.msk [vmem:[%s249 + $0x8] sm:$0xff] %vm1107, %v1114
      $region40: #{mres_conv_forward.2} parent=31 // pred_fallthru
        _
      %s1117 = smul.u32 8, %s21
      %p1118 = scmp.lt.s32.totalorder %s20, 1
      %s1119 = scalar_select %p1118, %s20, 1
      %p1120 = scmp.lt.s32.totalorder %s1117, 7
      %s1121 = scalar_select %p1120, %s1117, 7
      %s1122 = smul.addr %s1119, 16
      %s1123 = sadd.s32 %s1121, %s1122
      %s1124 = smul.addr %s1123, 4
      %s1125 = scalar_lea.vmem %s3, %s1124
      %p1126 = scmp.lt.s32.totalorder %s20, 1
      %s1127 = scalar_select %p1126, %s20, 1
      %s1128 = smul.addr %s1127, 2
      %s1129 = smul.addr %s1128, 8
      %s1130 = scalar_lea.vmem %s4, %s1129
      // Predicated region
      $region41: #{mres_conv_forward.2} parent=31 // pred_check
        %p1131 = pneg %p118
      $region42: #{mres_conv_forward.2} parent=31 // pred_check_branch
        %1133 = sbr.rel (%p1131) target = $region44
      $region43: #{mres_conv_forward.2} parent=31 // pred_region
        %s1134 = smul.u32 8, %s21
      $region44: #{mres_conv_forward.2} parent=31 // pred_fallthru
        _
      // Predicated region
      $region45: #{mres_conv_forward.2} parent=31 // pred_check
        %p1135 = pneg %p144
      $region46: #{mres_conv_forward.2} parent=31 // pred_check_branch
        %1137 = sbr.rel (%p1135) target = $region48
      $region47: #{mres_conv_forward.2} parent=31 // pred_region
        _
      $region48: #{mres_conv_forward.2} parent=31 // pred_fallthru
        _
    $region32: #{mres_conv_forward.2} parent=5 // pred_fallthru
      _
    %p1138 = scmp.le.s32.totalorder 2, %s11
    // Predicated region
    $region49: #{mres_conv_forward.2} parent=5 // pred_check
      %p1139 = pneg %p1138
    $region50: #{mres_conv_forward.2} parent=5 // pred_check_branch
      %1141 = sbr.rel (%p1139) target = $region52
    $region51: #{mres_conv_forward.2} parent=5 // pred_region
      %s1142 = ssub.s32 %s11, 2
      // Predicated region
      $region53: #{mres_conv_forward.2} parent=51 // pred_check
        %p1143 = pneg %p124
      $region54: #{mres_conv_forward.2} parent=51 // pred_check_branch
        %1145 = sbr.rel (%p1143) target = $region56
      $region55: #{mres_conv_forward.2} parent=51 // pred_region
        %s1146 = smul.u32 8, %s23
        %p1147 = scmp.lt.s32.totalorder %s22, 1
        %s1148 = scalar_select %p1147, %s22, 1
        %p1149 = scmp.lt.s32.totalorder %s1146, 7
        %s1150 = scalar_select %p1149, %s1146, 7
        %s1151 = smul.addr %s1148, 16
        %s1152 = sadd.s32 %s1150, %s1151
        %s1153 = smul.addr %s1152, 4
        %s1154 = scalar_lea.vmem %s3, %s1153
      $region56: #{mres_conv_forward.2} parent=51 // pred_fallthru
        _
      // Predicated region
      $region57: #{mres_conv_forward.2} parent=51 // pred_check
        %p1155 = pneg %p150
      $region58: #{mres_conv_forward.2} parent=51 // pred_check_branch
        %1157 = sbr.rel (%p1155) target = $region60
      $region59: #{mres_conv_forward.2} parent=51 // pred_region
        %p1158 = scmp.lt.s32.totalorder %s22, 1
        %s1159 = scalar_select %p1158, %s22, 1
        %s1160 = smul.addr %s1159, 2
        %s1161 = smul.addr %s1160, 8
        %s1162 = scalar_lea.vmem %s4, %s1161
      $region60: #{mres_conv_forward.2} parent=51 // pred_fallthru
        _
    $region52: #{mres_conv_forward.2} parent=5 // pred_fallthru
      _
  $region6: #{mres_conv_forward.2} parent=0 // loop_footer
    %s15 = sadd.s32 1, %s11
  $region7: #{mres_conv_forward.2} parent=0 // loop_footer_branch
    %10 = sbr.rel target = $region3
  $region8: #{mres_conv_forward.2} parent=0 // loop_exit
    _

// kernel: mres_conv_forward.3
$region0: #{mres_conv_forward.3}
  #allocation0 [shape = 'u32[]', space=smem, size = 0x4, offset = 0x4, fixed_abs, tag = 'smem constant byte address 0x4 - core index']
  #allocation1 [shape = 'u32[144,128]{1,0:T(1,128)}', space=vmem, size = 0x12000, scoped, tag = 'internal scratch']
  %s0 = inlined_call_operand.vmem [shape: bf16[2,80,1024], index: 0, kind: input, shape index: {}]
  %s1 = inlined_call_operand.vmem [shape: bf16[16,80], index: 1, kind: input, shape index: {}]
  %s2 = inlined_call_operand.vmem [shape: bf16[16,32], index: 2, kind: input, shape index: {}]
  %s3 = inlined_call_operand.vmem [shape: bf16[2,16,1024], index: 3, kind: input, shape index: {}]
  %s4 = inlined_call_operand.hbm [shape: f32[2,16,1024], index: 4, kind: output, shape index: {}]
  %s5 = sld [smem:[#allocation0]]
  $region49: #{mres_conv_forward.3} parent=0
    _
  %s7 = ssub.s32 1, %s5
  %s8 = scalar_select 0, %s7, %s5
  $region1: #{mres_conv_forward.3} parent=0
    #allocation2 [shape = 'u8[131072]{0}', space=vmem, size = 0x20000, scoped, tag = 'output window, operand 0']
    #allocation3 [shape = 's32[2]{0}', space=sflag, size = 0x8, scoped, tag = 'scoped memory for mres_conv_forward.3']
    %9 = vsyncpa [#allocation3], 0
    %s10 = scalar_lea.sflag [#allocation3], 1
    %11 = vsyncpa %s10, 0
    loop: start=0, step=1, limit=4
    $region2: #{mres_conv_forward.3} parent=1 // loop_pre_header
      _
    $region3: #{mres_conv_forward.3} parent=1 // loop_header
      %s13 = sphi 0, %s17
      %p14 = scmp.ge.s32.totalorder %s13, 4
      %s20 = sphi 0, %s32
      %s21 = sphi 0, %s28
      %s22 = sphi 0, %s20
      %s23 = sphi 0, %s21
      %s24 = sphi 0, %s22
      %s25 = sphi 0, %s23
      %s37 = sphi 0, %s39
      %s40 = sphi 0, %s37
      %s41 = sphi 0, %s40
      %s57 = sphi 0, %s41
      %s61 = sphi 0, %s61
      %s63 = sphi 0, %s61
      %s64 = sphi 0, %s63
      %s78 = sphi 0, %s64
      %s82 = sphi 0, %s82
      %s84 = sphi 0, %s82
      %s85 = sphi 0, %s84
      %s99 = sphi 0, %s85
      %s107 = sphi 0, %s109
      %s110 = sphi 0, %s107
      %s111 = sphi 0, %s110
      %s127 = sphi 0, %s111
      %s135 = sphi 0, %s137
      %s138 = sphi 0, %s135
      %s139 = sphi 0, %s138
      %s155 = sphi 0, %s139
    $region4: #{mres_conv_forward.3} parent=1 // loop_header_branch
      %16 = sbr.rel (%p14) target = $region8
    $region5: #{mres_conv_forward.3} parent=1 // loop_body
      %s18 = ssub.s32 %s13, 1
      %s19 = ssub.s32 %s13, 2
      %s26 = sadd.s32 1, %s21
      %p27 = scmp.ge.s32.totalorder %s26, 1
      %s28 = scalar_select %p27, 0, %s26
      %s29 = sadd.s32 1, %s20
      %s30 = scalar_select %p27, %s29, %s20
      %p31 = scmp.ge.s32.totalorder %s30, 2
      %s32 = scalar_select %p31, 0, %s30
      %s33 = ssub.s32 %s20, %s32
      %s34 = ssub.s32 %s21, %s28
      %s35 = sor.u32 %s33, %s34
      %p36 = scmp.eq.s32.totalorder %s35, 0
      %s38 = sadd.s32 %s37, 1
      %s39 = scalar_select %p36, %s37, %s38
      %p42 = pneg %p36
      %p43 = scmp.eq.s32.totalorder %s13, 1
      %p44 = por %p42, %p43
      %p45 = scmp.ne.s32.totalorder %s37, %s40
      %p46 = scmp.eq.s32.totalorder %s13, 0
      %p47 = por %p45, %p46
      %p48 = scmp.ne.s32.totalorder %s37, %s40
      %p49 = scmp.eq.s32.totalorder %s18, 1
      %p50 = por %p48, %p49
      %p51 = scmp.ne.s32.totalorder %s40, %s41
      %p52 = scmp.eq.s32.totalorder %s18, 0
      %p53 = por %p51, %p52
      %p54 = scmp.ne.s32.totalorder %s40, %s41
      %p55 = scmp.eq.s32.totalorder %s19, 1
      %p56 = por %p54, %p55
      %p58 = scmp.ne.s32.totalorder %s41, %s57
      %p59 = scmp.eq.s32.totalorder %s19, 0
      %p60 = por %p58, %p59
      %s62 = sadd.s32 %s61, 1
      %p65 = scmp.eq.s32.totalorder %s13, 1
      %p66 = scmp.ne.s32.totalorder %s61, %s63
      %p67 = scmp.eq.s32.totalorder %s13, 0
      %p68 = por %p66, %p67
      %p69 = scmp.ne.s32.totalorder %s61, %s63
      %p70 = scmp.eq.s32.totalorder %s18, 1
      %p71 = por %p69, %p70
      %p72 = scmp.ne.s32.totalorder %s63, %s64
      %p73 = scmp.eq.s32.totalorder %s18, 0
      %p74 = por %p72, %p73
      %p75 = scmp.ne.s32.totalorder %s63, %s64
      %p76 = scmp.eq.s32.totalorder %s19, 1
      %p77 = por %p75, %p76
      %p79 = scmp.ne.s32.totalorder %s64, %s78
      %p80 = scmp.eq.s32.totalorder %s19, 0
      %p81 = por %p79, %p80
      %s83 = sadd.s32 %s82, 1
      %p86 = scmp.eq.s32.totalorder %s13, 1
      %p87 = scmp.ne.s32.totalorder %s82, %s84
      %p88 = scmp.eq.s32.totalorder %s13, 0
      %p89 = por %p87, %p88
      %p90 = scmp.ne.s32.totalorder %s82, %s84
      %p91 = scmp.eq.s32.totalorder %s18, 1
      %p92 = por %p90, %p91
      %p93 = scmp.ne.s32.totalorder %s84, %s85
      %p94 = scmp.eq.s32.totalorder %s18, 0
      %p95 = por %p93, %p94
      %p96 = scmp.ne.s32.totalorder %s84, %s85
      %p97 = scmp.eq.s32.totalorder %s19, 1
      %p98 = por %p96, %p97
      %p100 = scmp.ne.s32.totalorder %s85, %s99
      %p101 = scmp.eq.s32.totalorder %s19, 0
      %p102 = por %p100, %p101
      %s103 = ssub.s32 %s20, %s32
      %s104 = ssub.s32 %s21, %s28
      %s105 = sor.u32 %s103, %s104
      %p106 = scmp.eq.s32.totalorder %s105, 0
      %s108 = sadd.s32 %s107, 1
      %s109 = scalar_select %p106, %s107, %s108
      %p112 = pneg %p106
      %p113 = scmp.eq.s32.totalorder %s13, 1
      %p114 = por %p112, %p113
      %p115 = scmp.ne.s32.totalorder %s107, %s110
      %p116 = scmp.eq.s32.totalorder %s13, 0
      %p117 = por %p115, %p116
      %p118 = scmp.ne.s32.totalorder %s107, %s110
      %p119 = scmp.eq.s32.totalorder %s18, 1
      %p120 = por %p118, %p119
      %p121 = scmp.ne.s32.totalorder %s110, %s111
      %p122 = scmp.eq.s32.totalorder %s18, 0
      %p123 = por %p121, %p122
      %p124 = scmp.ne.s32.totalorder %s110, %s111
      %p125 = scmp.eq.s32.totalorder %s19, 1
      %p126 = por %p124, %p125
      %p128 = scmp.ne.s32.totalorder %s111, %s127
      %p129 = scmp.eq.s32.totalorder %s19, 0
      %p130 = por %p128, %p129
      %s131 = ssub.s32 %s20, %s32
      %s132 = ssub.s32 %s21, %s28
      %s133 = sor.u32 %s131, %s132
      %p134 = scmp.eq.s32.totalorder %s133, 0
      %s136 = sadd.s32 %s135, 1
      %s137 = scalar_select %p134, %s135, %s136
      %p140 = pneg %p134
      %p141 = scmp.eq.s32.totalorder %s13, 1
      %p142 = por %p140, %p141
      %p143 = scmp.ne.s32.totalorder %s135, %s138
      %p144 = scmp.eq.s32.totalorder %s13, 0
      %p145 = por %p143, %p144
      %p146 = scmp.ne.s32.totalorder %s135, %s138
      %p147 = scmp.eq.s32.totalorder %s18, 1
      %p148 = por %p146, %p147
      %p149 = scmp.ne.s32.totalorder %s138, %s139
      %p150 = scmp.eq.s32.totalorder %s18, 0
      %p151 = por %p149, %p150
      %p152 = scmp.ne.s32.totalorder %s138, %s139
      %p153 = scmp.eq.s32.totalorder %s19, 1
      %p154 = por %p152, %p153
      %p156 = scmp.ne.s32.totalorder %s139, %s155
      %p157 = scmp.eq.s32.totalorder %s19, 0
      %p158 = por %p156, %p157
      %p159 = scmp.le.s32.totalorder 1, %s13
      %p160 = scmp.lt.s32.totalorder %s13, 3
      %p161 = pnand %p159, %p160
      %p162 = pneg %p161
      // Predicated region
      $region9: #{mres_conv_forward.3} parent=5 // pred_check
        _
      $region10: #{mres_conv_forward.3} parent=5 // pred_check_branch
        %164 = sbr.rel (%p161) target = $region12
      $region11: #{mres_conv_forward.3} parent=5 // pred_region
        %s165 = ssub.s32 %s13, 1
        // Predicated region
        $region13: #{mres_conv_forward.3} parent=11 // pred_check
          %p166 = pneg %p74
        $region14: #{mres_conv_forward.3} parent=11 // pred_check_branch
          %168 = sbr.rel (%p166) target = $region16
        $region15: #{mres_conv_forward.3} parent=11 // pred_region
          _
        $region16: #{mres_conv_forward.3} parent=11 // pred_fallthru
          _
        // Predicated region
        $region17: #{mres_conv_forward.3} parent=11 // pred_check
          %p169 = pneg %p95
        $region18: #{mres_conv_forward.3} parent=11 // pred_check_branch
          %171 = sbr.rel (%p169) target = $region20
        $region19: #{mres_conv_forward.3} parent=11 // pred_region
          _
        $region20: #{mres_conv_forward.3} parent=11 // pred_fallthru
          _
      $region12: #{mres_conv_forward.3} parent=5 // pred_fallthru
        _
      %p172 = scmp.lt.s32.totalorder %s13, 2
      // Predicated region
      $region21: #{mres_conv_forward.3} parent=5 // pred_check
        %p173 = pneg %p172
      $region22: #{mres_conv_forward.3} parent=5 // pred_check_branch
        %175 = sbr.rel (%p173) target = $region24
      $region23: #{mres_conv_forward.3} parent=5 // pred_region
        // Predicated region
        $region25: #{mres_conv_forward.3} parent=23 // pred_check
          %p176 = pneg %p47
        $region26: #{mres_conv_forward.3} parent=23 // pred_check_branch
          %178 = sbr.rel (%p176) target = $region28
        $region27: #{mres_conv_forward.3} parent=23 // pred_region
          %s179 = smul.u32 8, %s21
          %p180 = scmp.lt.s32.totalorder %s20, 1
          %s181 = scalar_select %p180, %s20, 1
          %p182 = scmp.lt.s32.totalorder %s179, 7
          %s183 = scalar_select %p182, %s179, 7
          %s184 = smul.addr %s181, 80
          %s185 = sadd.s32 %s183, %s184
          %s186 = smul.addr %s185, 4
          %s187 = scalar_lea.vmem %s0, %s186
          %s188 = smul.u32 8, %s21
        $region28: #{mres_conv_forward.3} parent=23 // pred_fallthru
          _
        // Predicated region
        $region29: #{mres_conv_forward.3} parent=23 // pred_check
          %p189 = pneg %p117
        $region30: #{mres_conv_forward.3} parent=23 // pred_check_branch
          %191 = sbr.rel (%p189) target = $region32
        $region31: #{mres_conv_forward.3} parent=23 // pred_region
          %s192 = smul.u32 8, %s21
          %p193 = scmp.lt.s32.totalorder %s20, 1
          %s194 = scalar_select %p193, %s20, 1
          %p195 = scmp.lt.s32.totalorder %s192, 7
          %s196 = scalar_select %p195, %s192, 7
          %s197 = smul.addr %s194, 16
          %s198 = sadd.s32 %s196, %s197
          %s199 = smul.addr %s198, 4
          %s200 = scalar_lea.vmem %s3, %s199
          %s201 = smul.u32 8, %s21
        $region32: #{mres_conv_forward.3} parent=23 // pred_fallthru
          _
      $region24: #{mres_conv_forward.3} parent=5 // pred_fallthru
        _
      %p202 = scmp.le.s32.totalorder 1, %s13
      %p203 = scmp.lt.s32.totalorder %s13, 3
      %p204 = pnand %p202, %p203
      %p205 = pneg %p204
      // Predicated region
      $region33: #{mres_conv_forward.3} parent=5 // pred_check
        _
      $region34: #{mres_conv_forward.3} parent=5 // pred_check_branch
        %207 = sbr.rel (%p204) target = $region36
      $region35: #{mres_conv_forward.3} parent=5 // pred_region
        %s208 = ssub.s32 %s13, 1
        %s209 = smul.u32 8, %s23
        %p210 = scmp.lt.s32.totalorder %s22, 1
        %s211 = scalar_select %p210, %s22, 1
        %p212 = scmp.lt.s32.totalorder %s209, 7
        %s213 = scalar_select %p212, %s209, 7
        %s214 = smul.addr %s211, 80
        %s215 = sadd.s32 %s213, %s214
        %s216 = smul.addr %s215, 4
        %s217 = scalar_lea.vmem %s0, %s216
        %p218 = pneg %p53
        %p219 = pneg %p50
        %p220 = pneg %p74
        %p221 = pneg %p71
        %p222 = pneg %p95
        %p223 = pneg %p92
        %s224 = smul.u32 8, %s23
        %p225 = scmp.lt.s32.totalorder %s22, 1
        %s226 = scalar_select %p225, %s22, 1
        %p227 = scmp.lt.s32.totalorder %s224, 7
        %s228 = scalar_select %p227, %s224, 7
        %s229 = smul.addr %s226, 16
        %s230 = sadd.s32 %s228, %s229
        %s231 = smul.addr %s230, 4
        %s232 = scalar_lea.vmem %s3, %s231
        %p233 = pneg %p123
        %p234 = pneg %p120
        %p235 = pneg %p151
        %p236 = pneg %p148
        %s237 = sand.u32 %s138, 1
        %s238 = scalar_lea.sflag [#allocation3], %s237
        %s239 = sand.u32 %s138, 1
        %s240 = smul.addr %s239, 128
        %s241 = scalar_lea.vmem [#allocation2], %s240
        %s242 = smul.u32 8, %s23
        %p243 = scmp.lt.s32.totalorder %s22, 1
        %s244 = scalar_select %p243, %s22, 1
        %p245 = scmp.lt.s32.totalorder %s242, 7
        %s246 = scalar_select %p245, %s242, 7
        %s247 = smul.addr %s244, 80
        %s248 = sadd.s32 %s246, %s247
        %s249 = smul.addr %s248, 4
        %s250 = scalar_lea.vmem %s0, %s249
        %s251 = smul.u32 8, %s23
        %s252 = smul.u32 8, %s23
        %p253 = scmp.lt.s32.totalorder %s22, 1
        %s254 = scalar_select %p253, %s22, 1
        %p255 = scmp.lt.s32.totalorder %s252, 7
        %s256 = scalar_select %p255, %s252, 7
        %s257 = smul.addr %s254, 16
        %s258 = sadd.s32 %s256, %s257
        %s259 = smul.addr %s258, 4
        %s260 = scalar_lea.vmem %s3, %s259
        %s261 = smul.u32 8, %s23
        %s262 = smul.u32 8, %s23
        %v264 = vld [vmem:[%s250] sm:$0xff]
        %v265 = vld [vmem:[%s250 + $0x8] sm:$0xff]
        %v266 = vld [vmem:[%s250 + $0x10] sm:$0xff]
        %v267 = vld [vmem:[%s250 + $0x18] sm:$0xff]
        %v268 = vld [vmem:[%s250 + $0x20] sm:$0xff]
        %v269 = vld [vmem:[%s250 + $0x28] sm:$0xff]
        %v270 = vld [vmem:[%s250 + $0x30] sm:$0xff]
        %v271 = vld [vmem:[%s250 + $0x38] sm:$0xff]
        %v272 = vld [vmem:[%s250 + $0x40] sm:$0xff]
        %v273 = vld [vmem:[%s250 + $0x48] sm:$0xff]
        %v274 = vld [vmem:[%s250 + $0x50] sm:$0xff]
        %v275 = vld [vmem:[%s250 + $0x58] sm:$0xff]
        %v276 = vld [vmem:[%s250 + $0x60] sm:$0xff]
        %v277 = vld [vmem:[%s250 + $0x68] sm:$0xff]
        %v278 = vld [vmem:[%s250 + $0x70] sm:$0xff]
        %v279 = vld [vmem:[%s250 + $0x78] sm:$0xff]
        %v280 = vld [vmem:[%s250 + $0x80] sm:$0xff]
        %v281 = vld [vmem:[%s250 + $0x88] sm:$0xff]
        %v282 = vld [vmem:[%s250 + $0x90] sm:$0xff]
        %v283 = vld [vmem:[%s250 + $0x98] sm:$0xff]
        %v284 = vld [vmem:[%s250 + $0xa0] sm:$0xff]
        %v285 = vld [vmem:[%s250 + $0xa8] sm:$0xff]
        %v286 = vld [vmem:[%s250 + $0xb0] sm:$0xff]
        %v287 = vld [vmem:[%s250 + $0xb8] sm:$0xff]
        %v288 = vld [vmem:[%s250 + $0xc0] sm:$0xff]
        %v289 = vld [vmem:[%s250 + $0xc8] sm:$0xff]
        %v290 = vld [vmem:[%s250 + $0xd0] sm:$0xff]
        %v291 = vld [vmem:[%s250 + $0xd8] sm:$0xff]
        %v292 = vld [vmem:[%s250 + $0xe0] sm:$0xff]
        %v293 = vld [vmem:[%s250 + $0xe8] sm:$0xff]
        %v294 = vld [vmem:[%s250 + $0xf0] sm:$0xff]
        %v295 = vld [vmem:[%s250 + $0xf8] sm:$0xff]
        %v296 = vld [vmem:[%s250 + $0x100] sm:$0xff]
        %v297 = vld [vmem:[%s250 + $0x108] sm:$0xff]
        %v298 = vld [vmem:[%s250 + $0x110] sm:$0xff]
        %v299 = vld [vmem:[%s250 + $0x118] sm:$0xff]
        %v300 = vld [vmem:[%s250 + $0x120] sm:$0xff]
        %v301 = vld [vmem:[%s250 + $0x128] sm:$0xff]
        %v302 = vld [vmem:[%s250 + $0x130] sm:$0xff]
        %v303 = vld [vmem:[%s250 + $0x138] sm:$0xff]
        %v304 = vsub.bf16 %v272, %v288
        %v305 = vsub.bf16 %v273, %v289
        %v306 = vsub.bf16 %v274, %v290
        %v307 = vsub.bf16 %v275, %v291
        %v308 = vsub.bf16 %v276, %v292
        %v309 = vsub.bf16 %v277, %v293
        %v310 = vsub.bf16 %v278, %v294
        %v311 = vsub.bf16 %v279, %v295
        %v312 = vand.u32 2147450879, %v304
        %v313 = vand.u32 2147450879, %v305
        %v314 = vand.u32 2147450879, %v306
        %v315 = vand.u32 2147450879, %v307
        %v316 = vand.u32 2147450879, %v308
        %v317 = vand.u32 2147450879, %v309
        %v318 = vand.u32 2147450879, %v310
        %v319 = vand.u32 2147450879, %v311
        %v320 = vsub.bf16 %v280, %v296
        %v321 = vsub.bf16 %v281, %v297
        %v322 = vsub.bf16 %v282, %v298
        %v323 = vsub.bf16 %v283, %v299
        %v324 = vsub.bf16 %v284, %v300
        %v325 = vsub.bf16 %v285, %v301
        %v326 = vsub.bf16 %v286, %v302
        %v327 = vsub.bf16 %v287, %v303
        %v328 = vand.u32 2147450879, %v320
        %v329 = vand.u32 2147450879, %v321
        %v330 = vand.u32 2147450879, %v322
        %v331 = vand.u32 2147450879, %v323
        %v332 = vand.u32 2147450879, %v324
        %v333 = vand.u32 2147450879, %v325
        %v334 = vand.u32 2147450879, %v326
        %v335 = vand.u32 2147450879, %v327
        %v344 = vunpack.c.l.b16 %v312
        %v345 = vunpack.c.h.b16 %v312
        %v346 = vunpack.c.l.b16 %v313
        %v347 = vunpack.c.h.b16 %v313
        %v348 = vunpack.c.l.b16 %v314
        %v349 = vunpack.c.h.b16 %v314
        %v350 = vunpack.c.l.b16 %v315
        %v351 = vunpack.c.h.b16 %v315
        %v352 = vunpack.c.l.b16 %v316
        %v353 = vunpack.c.h.b16 %v316
        %v354 = vunpack.c.l.b16 %v317
        %v355 = vunpack.c.h.b16 %v317
        %v356 = vunpack.c.l.b16 %v318
        %v357 = vunpack.c.h.b16 %v318
        %v358 = vunpack.c.l.b16 %v319
        %v359 = vunpack.c.h.b16 %v319
        %v360 = vpack.c.b16 %v352, %v344
        %v361 = vpack.c.b16 %v353, %v345
        %v362 = vpack.c.b16 %v354, %v346
        %v363 = vpack.c.b16 %v355, %v347
        %v364 = vpack.c.b16 %v356, %v348
        %v365 = vpack.c.b16 %v357, %v349
        %v366 = vpack.c.b16 %v358, %v350
        %v367 = vpack.c.b16 %v359, %v351
        %v384 = vunpack.c.l.b16 %v328
        %v385 = vunpack.c.h.b16 %v328
        %v386 = vunpack.c.l.b16 %v329
        %v387 = vunpack.c.h.b16 %v329
        %v388 = vunpack.c.l.b16 %v330
        %v389 = vunpack.c.h.b16 %v330
        %v390 = vunpack.c.l.b16 %v331
        %v391 = vunpack.c.h.b16 %v331
        %v392 = vunpack.c.l.b16 %v332
        %v393 = vunpack.c.h.b16 %v332
        %v394 = vunpack.c.l.b16 %v333
        %v395 = vunpack.c.h.b16 %v333
        %v396 = vunpack.c.l.b16 %v334
        %v397 = vunpack.c.h.b16 %v334
        %v398 = vunpack.c.l.b16 %v335
        %v399 = vunpack.c.h.b16 %v335
        %v400 = vpack.c.b16 %v392, %v384
        %v401 = vpack.c.b16 %v393, %v385
        %v402 = vpack.c.b16 %v394, %v386
        %v403 = vpack.c.b16 %v395, %v387
        %v404 = vpack.c.b16 %v396, %v388
        %v405 = vpack.c.b16 %v397, %v389
        %v406 = vpack.c.b16 %v398, %v390
        %v407 = vpack.c.b16 %v399, %v391
        %v416 = vld [vmem:[%s1] sm:$0xf]
        %v417 = vld [vmem:[%s1 + $0x4] sm:$0xf]
        %v418 = vld [vmem:[%s2] sm:$0xf]
        %v419 = vld [vmem:[%s2 + $0x4] sm:$0xf]
        %v422 = vunpack.c.l.b16 %v418
        %v423 = vunpack.c.l.b16 %v419
        %v424 = vpack.c.b16 %v423, %v422
        %vm425 = vcmask 261120
        %v427 = vsel %vm425, %v424, 0
        %429 = vmatprep.subr.bf16.mxu0 %v361
        %430 = vmatpush1.bf16.msra.mxu0 %v360
        %431 = vmatprep.subr.bf16.mxu0 %v401
        %432 = vmatpush1.bf16.msra.mxu0 %v400
        %433 = vmatprep.subr.bf16.mxu0 0
        %434 = vmatpush1.bf16.msra.mxu0 0
        %435 = vmatprep.subr.bf16.mxu0 0
        %436 = vmatpush1.bf16.msra.mxu0 0
        %437 = vmatprep.subr.bf16.mxu0 0
        %438 = vmatpush1.bf16.msra.mxu0 0
        %439 = vmatprep.subr.bf16.mxu0 0
        %440 = vmatpush1.bf16.msra.mxu0 0
        %441 = vmatprep.subr.bf16.mxu0 0
        %442 = vmatpush1.bf16.msra.mxu0 0
        %443 = vmatprep.subr.bf16.mxu0 0
        %444 = vmatpush1.bf16.msra.mxu0 0
        %445 = vmatprep.subr.bf16.mxu0 0
        %446 = vmatpush1.bf16.msra.mxu0 0
        %447 = vmatprep.subr.bf16.mxu0 0
        %448 = vmatpush1.bf16.msra.mxu0 0
        %449 = vmatprep.subr.bf16.mxu0 0
        %450 = vmatpush1.bf16.msra.mxu0 0
        %451 = vmatprep.subr.bf16.mxu0 0
        %452 = vmatpush1.bf16.msra.mxu0 0
        %453 = vmatprep.subr.bf16.mxu0 0
        %454 = vmatpush1.bf16.msra.mxu0 0
        %455 = vmatprep.subr.bf16.mxu0 0
        %456 = vmatpush1.bf16.msra.mxu0 0
        %457 = vmatprep.subr.bf16.mxu0 0
        %458 = vmatpush1.bf16.msra.mxu0 0
        %459 = vmatprep.subr.bf16.mxu0 0
        %460 = vmatpush1.bf16.msra.mxu0 0
        %461 = vmatprep.mubr.bf16.mxu0 0
        %462 = vmatmul.mubr.bf16.gmra.mrb[0].mxu0 %v427
        %v463 = vpop.f32.mrb[0].mxu0
        %v464 = vadd.f32 0.0, %v463
        %v465 = vpop.f32.mrb[0].mxu0
        %v466 = vadd.f32 0.0, %v465
        %v467 = vpop.f32.mrb[0].mxu0
        %v468 = vadd.f32 0.0, %v467
        %v469 = vpop.f32.mrb[0].mxu0
        %v470 = vadd.f32 0.0, %v469
        %471 = vdwg.mxu0
        %472 = vmatprep.subr.bf16.mxu0 %v363
        %473 = vmatpush1.bf16.msra.mxu0 %v362
        %474 = vmatprep.subr.bf16.mxu0 %v403
        %475 = vmatpush1.bf16.msra.mxu0 %v402
        %476 = vmatprep.subr.bf16.mxu0 0
        %477 = vmatpush1.bf16.msra.mxu0 0
        %478 = vmatprep.subr.bf16.mxu0 0
        %479 = vmatpush1.bf16.msra.mxu0 0
        %480 = vmatprep.subr.bf16.mxu0 0
        %481 = vmatpush1.bf16.msra.mxu0 0
        %482 = vmatprep.subr.bf16.mxu0 0
        %483 = vmatpush1.bf16.msra.mxu0 0
        %484 = vmatprep.subr.bf16.mxu0 0
        %485 = vmatpush1.bf16.msra.mxu0 0
        %486 = vmatprep.subr.bf16.mxu0 0
        %487 = vmatpush1.bf16.msra.mxu0 0
        %488 = vmatprep.subr.bf16.mxu0 0
        %489 = vmatpush1.bf16.msra.mxu0 0
        %490 = vmatprep.subr.bf16.mxu0 0
        %491 = vmatpush1.bf16.msra.mxu0 0
        %492 = vmatprep.subr.bf16.mxu0 0
        %493 = vmatpush1.bf16.msra.mxu0 0
        %494 = vmatprep.subr.bf16.mxu0 0
        %495 = vmatpush1.bf16.msra.mxu0 0
        %496 = vmatprep.subr.bf16.mxu0 0
        %497 = vmatpush1.bf16.msra.mxu0 0
        %498 = vmatprep.subr.bf16.mxu0 0
        %499 = vmatpush1.bf16.msra.mxu0 0
        %500 = vmatprep.subr.bf16.mxu0 0
        %501 = vmatpush1.bf16.msra.mxu0 0
        %502 = vmatprep.subr.bf16.mxu0 0
        %503 = vmatpush1.bf16.msra.mxu0 0
        %504 = vmatprep.mubr.bf16.mxu0 0
        %505 = vmatmul.mubr.bf16.gmra.mrb[0].mxu0 %v427
        %v506 = vpop.f32.mrb[0].mxu0
        %v507 = vadd.f32 0.0, %v506
        %v508 = vpop.f32.mrb[0].mxu0
        %v509 = vadd.f32 0.0, %v508
        %v510 = vpop.f32.mrb[0].mxu0
        %v511 = vadd.f32 0.0, %v510
        %v512 = vpop.f32.mrb[0].mxu0
        %v513 = vadd.f32 0.0, %v512
        %514 = vdwg.mxu0
        %515 = vmatprep.subr.bf16.mxu0 %v365
        %516 = vmatpush1.bf16.msra.mxu0 %v364
        %517 = vmatprep.subr.bf16.mxu0 %v405
        %518 = vmatpush1.bf16.msra.mxu0 %v404
        %519 = vmatprep.subr.bf16.mxu0 0
        %520 = vmatpush1.bf16.msra.mxu0 0
        %521 = vmatprep.subr.bf16.mxu0 0
        %522 = vmatpush1.bf16.msra.mxu0 0
        %523 = vmatprep.subr.bf16.mxu0 0
        %524 = vmatpush1.bf16.msra.mxu0 0
        %525 = vmatprep.subr.bf16.mxu0 0
        %526 = vmatpush1.bf16.msra.mxu0 0
        %527 = vmatprep.subr.bf16.mxu0 0
        %528 = vmatpush1.bf16.msra.mxu0 0
        %529 = vmatprep.subr.bf16.mxu0 0
        %530 = vmatpush1.bf16.msra.mxu0 0
        %531 = vmatprep.subr.bf16.mxu0 0
        %532 = vmatpush1.bf16.msra.mxu0 0
        %533 = vmatprep.subr.bf16.mxu0 0
        %534 = vmatpush1.bf16.msra.mxu0 0
        %535 = vmatprep.subr.bf16.mxu0 0
        %536 = vmatpush1.bf16.msra.mxu0 0
        %537 = vmatprep.subr.bf16.mxu0 0
        %538 = vmatpush1.bf16.msra.mxu0 0
        %539 = vmatprep.subr.bf16.mxu0 0
        %540 = vmatpush1.bf16.msra.mxu0 0
        %541 = vmatprep.subr.bf16.mxu0 0
        %542 = vmatpush1.bf16.msra.mxu0 0
        %543 = vmatprep.subr.bf16.mxu0 0
        %544 = vmatpush1.bf16.msra.mxu0 0
        %545 = vmatprep.subr.bf16.mxu0 0
        %546 = vmatpush1.bf16.msra.mxu0 0
        %547 = vmatprep.mubr.bf16.mxu0 0
        %548 = vmatmul.mubr.bf16.gmra.mrb[0].mxu0 %v427
        %v549 = vpop.f32.mrb[0].mxu0
        %v550 = vadd.f32 0.0, %v549
        %v551 = vpop.f32.mrb[0].mxu0
        %v552 = vadd.f32 0.0, %v551
        %v553 = vpop.f32.mrb[0].mxu0
        %v554 = vadd.f32 0.0, %v553
        %v555 = vpop.f32.mrb[0].mxu0
        %v556 = vadd.f32 0.0, %v555
        %557 = vdwg.mxu0
        %558 = vmatprep.subr.bf16.mxu0 %v367
        %559 = vmatpush1.bf16.msra.mxu0 %v366
        %560 = vmatprep.subr.bf16.mxu0 %v407
        %561 = vmatpush1.bf16.msra.mxu0 %v406
        %562 = vmatprep.subr.bf16.mxu0 0
        %563 = vmatpush1.bf16.msra.mxu0 0
        %564 = vmatprep.subr.bf16.mxu0 0
        %565 = vmatpush1.bf16.msra.mxu0 0
        %566 = vmatprep.subr.bf16.mxu0 0
        %567 = vmatpush1.bf16.msra.mxu0 0
        %568 = vmatprep.subr.bf16.mxu0 0
        %569 = vmatpush1.bf16.msra.mxu0 0
        %570 = vmatprep.subr.bf16.mxu0 0
        %571 = vmatpush1.bf16.msra.mxu0 0
        %572 = vmatprep.subr.bf16.mxu0 0
        %573 = vmatpush1.bf16.msra.mxu0 0
        %574 = vmatprep.subr.bf16.mxu0 0
        %575 = vmatpush1.bf16.msra.mxu0 0
        %576 = vmatprep.subr.bf16.mxu0 0
        %577 = vmatpush1.bf16.msra.mxu0 0
        %578 = vmatprep.subr.bf16.mxu0 0
        %579 = vmatpush1.bf16.msra.mxu0 0
        %580 = vmatprep.subr.bf16.mxu0 0
        %581 = vmatpush1.bf16.msra.mxu0 0
        %582 = vmatprep.subr.bf16.mxu0 0
        %583 = vmatpush1.bf16.msra.mxu0 0
        %584 = vmatprep.subr.bf16.mxu0 0
        %585 = vmatpush1.bf16.msra.mxu0 0
        %586 = vmatprep.subr.bf16.mxu0 0
        %587 = vmatpush1.bf16.msra.mxu0 0
        %588 = vmatprep.subr.bf16.mxu0 0
        %589 = vmatpush1.bf16.msra.mxu0 0
        %590 = vmatprep.mubr.bf16.mxu0 0
        %591 = vmatmul.mubr.bf16.gmra.mrb[0].mxu0 %v427
        %v592 = vpop.f32.mrb[0].mxu0
        %v593 = vadd.f32 0.0, %v592
        %v594 = vpop.f32.mrb[0].mxu0
        %v595 = vadd.f32 0.0, %v594
        %v596 = vpop.f32.mrb[0].mxu0
        %v597 = vadd.f32 0.0, %v596
        %v598 = vpop.f32.mrb[0].mxu0
        %v599 = vadd.f32 0.0, %v598
        %600 = vdwg.mxu0
        %v603 = vunpack.c.l.b16 %v416
        %v604 = vunpack.c.l.b16 %v417
        %v605 = vpack.c.b16 %v604, %v603
        %v646 = vunpack.c.l.b16 %v264
        %v647 = vunpack.c.h.b16 %v264
        %v648 = vunpack.c.l.b16 %v265
        %v649 = vunpack.c.h.b16 %v265
        %v650 = vunpack.c.l.b16 %v266
        %v651 = vunpack.c.h.b16 %v266
        %v652 = vunpack.c.l.b16 %v267
        %v653 = vunpack.c.h.b16 %v267
        %v654 = vunpack.c.l.b16 %v268
        %v655 = vunpack.c.h.b16 %v268
        %v656 = vunpack.c.l.b16 %v269
        %v657 = vunpack.c.h.b16 %v269
        %v658 = vunpack.c.l.b16 %v270
        %v659 = vunpack.c.h.b16 %v270
        %v660 = vunpack.c.l.b16 %v271
        %v661 = vunpack.c.h.b16 %v271
        %v662 = vunpack.c.l.b16 %v272
        %v663 = vunpack.c.h.b16 %v272
        %v664 = vunpack.c.l.b16 %v273
        %v665 = vunpack.c.h.b16 %v273
        %v666 = vunpack.c.l.b16 %v274
        %v667 = vunpack.c.h.b16 %v274
        %v668 = vunpack.c.l.b16 %v275
        %v669 = vunpack.c.h.b16 %v275
        %v670 = vunpack.c.l.b16 %v276
        %v671 = vunpack.c.h.b16 %v276
        %v672 = vunpack.c.l.b16 %v277
        %v673 = vunpack.c.h.b16 %v277
        %v674 = vunpack.c.l.b16 %v278
        %v675 = vunpack.c.h.b16 %v278
        %v676 = vunpack.c.l.b16 %v279
        %v677 = vunpack.c.h.b16 %v279
        %v678 = vunpack.c.l.b16 %v280
        %v679 = vunpack.c.h.b16 %v280
        %v680 = vunpack.c.l.b16 %v281
        %v681 = vunpack.c.h.b16 %v281
        %v682 = vunpack.c.l.b16 %v282
        %v683 = vunpack.c.h.b16 %v282
        %v684 = vunpack.c.l.b16 %v283
        %v685 = vunpack.c.h.b16 %v283
        %v686 = vunpack.c.l.b16 %v284
        %v687 = vunpack.c.h.b16 %v284
        %v688 = vunpack.c.l.b16 %v285
        %v689 = vunpack.c.h.b16 %v285
        %v690 = vunpack.c.l.b16 %v286
        %v691 = vunpack.c.h.b16 %v286
        %v692 = vunpack.c.l.b16 %v287
        %v693 = vunpack.c.h.b16 %v287
        %v694 = vunpack.c.l.b16 %v288
        %v695 = vunpack.c.h.b16 %v288
        %v696 = vunpack.c.l.b16 %v289
        %v697 = vunpack.c.h.b16 %v289
        %v698 = vunpack.c.l.b16 %v290
        %v699 = vunpack.c.h.b16 %v290
        %v700 = vunpack.c.l.b16 %v291
        %v701 = vunpack.c.h.b16 %v291
        %v702 = vunpack.c.l.b16 %v292
        %v703 = vunpack.c.h.b16 %v292
        %v704 = vunpack.c.l.b16 %v293
        %v705 = vunpack.c.h.b16 %v293
        %v706 = vunpack.c.l.b16 %v294
        %v707 = vunpack.c.h.b16 %v294
        %v708 = vunpack.c.l.b16 %v295
        %v709 = vunpack.c.h.b16 %v295
        %v710 = vunpack.c.l.b16 %v296
        %v711 = vunpack.c.h.b16 %v296
        %v712 = vunpack.c.l.b16 %v297
        %v713 = vunpack.c.h.b16 %v297
        %v714 = vunpack.c.l.b16 %v298
        %v715 = vunpack.c.h.b16 %v298
        %v716 = vunpack.c.l.b16 %v299
        %v717 = vunpack.c.h.b16 %v299
        %v718 = vunpack.c.l.b16 %v300
        %v719 = vunpack.c.h.b16 %v300
        %v720 = vunpack.c.l.b16 %v301
        %v721 = vunpack.c.h.b16 %v301
        %v722 = vunpack.c.l.b16 %v302
        %v723 = vunpack.c.h.b16 %v302
        %v724 = vunpack.c.l.b16 %v303
        %v725 = vunpack.c.h.b16 %v303
        %v726 = vpack.c.b16 %v654, %v646
        %v727 = vpack.c.b16 %v655, %v647
        %v728 = vpack.c.b16 %v656, %v648
        %v729 = vpack.c.b16 %v657, %v649
        %v730 = vpack.c.b16 %v658, %v650
        %v731 = vpack.c.b16 %v659, %v651
        %v732 = vpack.c.b16 %v660, %v652
        %v733 = vpack.c.b16 %v661, %v653
        %v734 = vpack.c.b16 %v670, %v662
        %v735 = vpack.c.b16 %v671, %v663
        %v736 = vpack.c.b16 %v672, %v664
        %v737 = vpack.c.b16 %v673, %v665
        %v738 = vpack.c.b16 %v674, %v666
        %v739 = vpack.c.b16 %v675, %v667
        %v740 = vpack.c.b16 %v676, %v668
        %v741 = vpack.c.b16 %v677, %v669
        %v742 = vpack.c.b16 %v686, %v678
        %v743 = vpack.c.b16 %v687, %v679
        %v744 = vpack.c.b16 %v688, %v680
        %v745 = vpack.c.b16 %v689, %v681
        %v746 = vpack.c.b16 %v690, %v682
        %v747 = vpack.c.b16 %v691, %v683
        %v748 = vpack.c.b16 %v692, %v684
        %v749 = vpack.c.b16 %v693, %v685
        %v750 = vpack.c.b16 %v702, %v694
        %v751 = vpack.c.b16 %v703, %v695
        %v752 = vpack.c.b16 %v704, %v696
        %v753 = vpack.c.b16 %v705, %v697
        %v754 = vpack.c.b16 %v706, %v698
        %v755 = vpack.c.b16 %v707, %v699
        %v756 = vpack.c.b16 %v708, %v700
        %v757 = vpack.c.b16 %v709, %v701
        %v758 = vpack.c.b16 %v718, %v710
        %v759 = vpack.c.b16 %v719, %v711
        %v760 = vpack.c.b16 %v720, %v712
        %v761 = vpack.c.b16 %v721, %v713
        %v762 = vpack.c.b16 %v722, %v714
        %v763 = vpack.c.b16 %v723, %v715
        %v764 = vpack.c.b16 %v724, %v716
        %v765 = vpack.c.b16 %v725, %v717
        %vm806 = vcmask 654336
        %v808 = vsel %vm806, %v605, 0
        %810 = vmatprep.subr.bf16.mxu0 %v727
        %811 = vmatpush1.bf16.msra.mxu0 %v726
        %812 = vmatprep.subr.bf16.mxu0 %v735
        %813 = vmatpush1.bf16.msra.mxu0 %v734
        %814 = vmatprep.subr.bf16.mxu0 %v743
        %815 = vmatpush1.bf16.msra.mxu0 %v742
        %816 = vmatprep.subr.bf16.mxu0 %v751
        %817 = vmatpush1.bf16.msra.mxu0 %v750
        %818 = vmatprep.subr.bf16.mxu0 %v759
        %819 = vmatpush1.bf16.msra.mxu0 %v758
        %820 = vmatprep.subr.bf16.mxu0 0
        %821 = vmatpush1.bf16.msra.mxu0 0
        %822 = vmatprep.subr.bf16.mxu0 0
        %823 = vmatpush1.bf16.msra.mxu0 0
        %824 = vmatprep.subr.bf16.mxu0 0
        %825 = vmatpush1.bf16.msra.mxu0 0
        %826 = vmatprep.subr.bf16.mxu0 0
        %827 = vmatpush1.bf16.msra.mxu0 0
        %828 = vmatprep.subr.bf16.mxu0 0
        %829 = vmatpush1.bf16.msra.mxu0 0
        %830 = vmatprep.subr.bf16.mxu0 0
        %831 = vmatpush1.bf16.msra.mxu0 0
        %832 = vmatprep.subr.bf16.mxu0 0
        %833 = vmatpush1.bf16.msra.mxu0 0
        %834 = vmatprep.subr.bf16.mxu0 0
        %835 = vmatpush1.bf16.msra.mxu0 0
        %836 = vmatprep.subr.bf16.mxu0 0
        %837 = vmatpush1.bf16.msra.mxu0 0
        %838 = vmatprep.subr.bf16.mxu0 0
        %839 = vmatpush1.bf16.msra.mxu0 0
        %840 = vmatprep.subr.bf16.mxu0 0
        %841 = vmatpush1.bf16.msra.mxu0 0
        %842 = vmatprep.mubr.bf16.mxu0 0
        %843 = vmatmul.mubr.bf16.gmra.mrb[0].mxu0 %v808
        %v844 = vpop.f32.mrb[0].mxu0
        %v845 = vadd.f32 %v464, %v844
        %v846 = vpop.f32.mrb[0].mxu0
        %v847 = vadd.f32 %v466, %v846
        %v848 = vpop.f32.mrb[0].mxu0
        %v849 = vadd.f32 %v468, %v848
        %v850 = vpop.f32.mrb[0].mxu0
        %v851 = vadd.f32 %v470, %v850
        %852 = vdwg.mxu0
        %853 = vmatprep.subr.bf16.mxu0 %v729
        %854 = vmatpush1.bf16.msra.mxu0 %v728
        %855 = vmatprep.subr.bf16.mxu0 %v737
        %856 = vmatpush1.bf16.msra.mxu0 %v736
        %857 = vmatprep.subr.bf16.mxu0 %v745
        %858 = vmatpush1.bf16.msra.mxu0 %v744
        %859 = vmatprep.subr.bf16.mxu0 %v753
        %860 = vmatpush1.bf16.msra.mxu0 %v752
        %861 = vmatprep.subr.bf16.mxu0 %v761
        %862 = vmatpush1.bf16.msra.mxu0 %v760
        %863 = vmatprep.subr.bf16.mxu0 0
        %864 = vmatpush1.bf16.msra.mxu0 0
        %865 = vmatprep.subr.bf16.mxu0 0
        %866 = vmatpush1.bf16.msra.mxu0 0
        %867 = vmatprep.subr.bf16.mxu0 0
        %868 = vmatpush1.bf16.msra.mxu0 0
        %869 = vmatprep.subr.bf16.mxu0 0
        %870 = vmatpush1.bf16.msra.mxu0 0
        %871 = vmatprep.subr.bf16.mxu0 0
        %872 = vmatpush1.bf16.msra.mxu0 0
        %873 = vmatprep.subr.bf16.mxu0 0
        %874 = vmatpush1.bf16.msra.mxu0 0
        %875 = vmatprep.subr.bf16.mxu0 0
        %876 = vmatpush1.bf16.msra.mxu0 0
        %877 = vmatprep.subr.bf16.mxu0 0
        %878 = vmatpush1.bf16.msra.mxu0 0
        %879 = vmatprep.subr.bf16.mxu0 0
        %880 = vmatpush1.bf16.msra.mxu0 0
        %881 = vmatprep.subr.bf16.mxu0 0
        %882 = vmatpush1.bf16.msra.mxu0 0
        %883 = vmatprep.subr.bf16.mxu0 0
        %884 = vmatpush1.bf16.msra.mxu0 0
        %885 = vmatprep.mubr.bf16.mxu0 0
        %886 = vmatmul.mubr.bf16.gmra.mrb[0].mxu0 %v808
        %v887 = vpop.f32.mrb[0].mxu0
        %v888 = vadd.f32 %v507, %v887
        %v889 = vpop.f32.mrb[0].mxu0
        %v890 = vadd.f32 %v509, %v889
        %v891 = vpop.f32.mrb[0].mxu0
        %v892 = vadd.f32 %v511, %v891
        %v893 = vpop.f32.mrb[0].mxu0
        %v894 = vadd.f32 %v513, %v893
        %895 = vdwg.mxu0
        %896 = vmatprep.subr.bf16.mxu0 %v731
        %897 = vmatpush1.bf16.msra.mxu0 %v730
        %898 = vmatprep.subr.bf16.mxu0 %v739
        %899 = vmatpush1.bf16.msra.mxu0 %v738
        %900 = vmatprep.subr.bf16.mxu0 %v747
        %901 = vmatpush1.bf16.msra.mxu0 %v746
        %902 = vmatprep.subr.bf16.mxu0 %v755
        %903 = vmatpush1.bf16.msra.mxu0 %v754
        %904 = vmatprep.subr.bf16.mxu0 %v763
        %905 = vmatpush1.bf16.msra.mxu0 %v762
        %906 = vmatprep.subr.bf16.mxu0 0
        %907 = vmatpush1.bf16.msra.mxu0 0
        %908 = vmatprep.subr.bf16.mxu0 0
        %909 = vmatpush1.bf16.msra.mxu0 0
        %910 = vmatprep.subr.bf16.mxu0 0
        %911 = vmatpush1.bf16.msra.mxu0 0
        %912 = vmatprep.subr.bf16.mxu0 0
        %913 = vmatpush1.bf16.msra.mxu0 0
        %914 = vmatprep.subr.bf16.mxu0 0
        %915 = vmatpush1.bf16.msra.mxu0 0
        %916 = vmatprep.subr.bf16.mxu0 0
        %917 = vmatpush1.bf16.msra.mxu0 0
        %918 = vmatprep.subr.bf16.mxu0 0
        %919 = vmatpush1.bf16.msra.mxu0 0
        %920 = vmatprep.subr.bf16.mxu0 0
        %921 = vmatpush1.bf16.msra.mxu0 0
        %922 = vmatprep.subr.bf16.mxu0 0
        %923 = vmatpush1.bf16.msra.mxu0 0
        %924 = vmatprep.subr.bf16.mxu0 0
        %925 = vmatpush1.bf16.msra.mxu0 0
        %926 = vmatprep.subr.bf16.mxu0 0
        %927 = vmatpush1.bf16.msra.mxu0 0
        %928 = vmatprep.mubr.bf16.mxu0 0
        %929 = vmatmul.mubr.bf16.gmra.mrb[0].mxu0 %v808
        %v930 = vpop.f32.mrb[0].mxu0
        %v931 = vadd.f32 %v550, %v930
        %v932 = vpop.f32.mrb[0].mxu0
        %v933 = vadd.f32 %v552, %v932
        %v934 = vpop.f32.mrb[0].mxu0
        %v935 = vadd.f32 %v554, %v934
        %v936 = vpop.f32.mrb[0].mxu0
        %v937 = vadd.f32 %v556, %v936
        %938 = vdwg.mxu0
        %939 = vmatprep.subr.bf16.mxu0 %v733
        %940 = vmatpush1.bf16.msra.mxu0 %v732
        %941 = vmatprep.subr.bf16.mxu0 %v741
        %942 = vmatpush1.bf16.msra.mxu0 %v740
        %943 = vmatprep.subr.bf16.mxu0 %v749
        %944 = vmatpush1.bf16.msra.mxu0 %v748
        %945 = vmatprep.subr.bf16.mxu0 %v757
        %946 = vmatpush1.bf16.msra.mxu0 %v756
        %947 = vmatprep.subr.bf16.mxu0 %v765
        %948 = vmatpush1.bf16.msra.mxu0 %v764
        %949 = vmatprep.subr.bf16.mxu0 0
        %950 = vmatpush1.bf16.msra.mxu0 0
        %951 = vmatprep.subr.bf16.mxu0 0
        %952 = vmatpush1.bf16.msra.mxu0 0
        %953 = vmatprep.subr.bf16.mxu0 0
        %954 = vmatpush1.bf16.msra.mxu0 0
        %955 = vmatprep.subr.bf16.mxu0 0
        %956 = vmatpush1.bf16.msra.mxu0 0
        %957 = vmatprep.subr.bf16.mxu0 0
        %958 = vmatpush1.bf16.msra.mxu0 0
        %959 = vmatprep.subr.bf16.mxu0 0
        %960 = vmatpush1.bf16.msra.mxu0 0
        %961 = vmatprep.subr.bf16.mxu0 0
        %962 = vmatpush1.bf16.msra.mxu0 0
        %963 = vmatprep.subr.bf16.mxu0 0
        %964 = vmatpush1.bf16.msra.mxu0 0
        %965 = vmatprep.subr.bf16.mxu0 0
        %966 = vmatpush1.bf16.msra.mxu0 0
        %967 = vmatprep.subr.bf16.mxu0 0
        %968 = vmatpush1.bf16.msra.mxu0 0
        %969 = vmatprep.subr.bf16.mxu0 0
        %970 = vmatpush1.bf16.msra.mxu0 0
        %971 = vmatprep.mubr.bf16.mxu0 0
        %972 = vmatmul.mubr.bf16.gmra.mrb[0].mxu0 %v808
        %v973 = vpop.f32.mrb[0].mxu0
        %v974 = vadd.f32 %v593, %v973
        %v975 = vpop.f32.mrb[0].mxu0
        %v976 = vadd.f32 %v595, %v975
        %v977 = vpop.f32.mrb[0].mxu0
        %v978 = vadd.f32 %v597, %v977
        %v979 = vpop.f32.mrb[0].mxu0
        %v980 = vadd.f32 %v599, %v979
        %981 = vdwg.mxu0
        %v982 = vld [vmem:[%s260] sm:$0xff]
        %v983 = vld [vmem:[%s260 + $0x8] sm:$0xff]
        %v984 = vld [vmem:[%s260 + $0x10] sm:$0xff]
        %v985 = vld [vmem:[%s260 + $0x18] sm:$0xff]
        %v986 = vld [vmem:[%s260 + $0x20] sm:$0xff]
        %v987 = vld [vmem:[%s260 + $0x28] sm:$0xff]
        %v988 = vld [vmem:[%s260 + $0x30] sm:$0xff]
        %v989 = vld [vmem:[%s260 + $0x38] sm:$0xff]
        %v990 = vunpack.c.l.bf16 %v982
        %v991 = vunpack.c.h.bf16 %v982
        %v992 = vunpack.c.l.bf16 %v983
        %v993 = vunpack.c.h.bf16 %v983
        %v994 = vunpack.c.l.bf16 %v984
        %v995 = vunpack.c.h.bf16 %v984
        %v996 = vunpack.c.l.bf16 %v985
        %v997 = vunpack.c.h.bf16 %v985
        %v998 = vunpack.c.l.bf16 %v986
        %v999 = vunpack.c.h.bf16 %v986
        %v1000 = vunpack.c.l.bf16 %v987
        %v1001 = vunpack.c.h.bf16 %v987
        %v1002 = vunpack.c.l.bf16 %v988
        %v1003 = vunpack.c.h.bf16 %v988
        %v1004 = vunpack.c.l.bf16 %v989
        %v1005 = vunpack.c.h.bf16 %v989
        %v1006 = vadd.f32 %v845, %v990
        %v1007 = vadd.f32 %v847, %v991
        %v1008 = vadd.f32 %v888, %v992
        %v1009 = vadd.f32 %v890, %v993
        %v1010 = vadd.f32 %v931, %v994
        %v1011 = vadd.f32 %v933, %v995
        %v1012 = vadd.f32 %v974, %v996
        %v1013 = vadd.f32 %v976, %v997
        %v1014 = vadd.f32 %v849, %v998
        %v1015 = vadd.f32 %v851, %v999
        %v1016 = vadd.f32 %v892, %v1000
        %v1017 = vadd.f32 %v894, %v1001
        %v1018 = vadd.f32 %v935, %v1002
        %v1019 = vadd.f32 %v937, %v1003
        %v1020 = vadd.f32 %v978, %v1004
        %v1021 = vadd.f32 %v980, %v1005
        %v1022 = vmax.f32 %v1006, 0.0
        %v1023 = vmax.f32 %v1007, 0.0
        %v1024 = vmax.f32 %v1008, 0.0
        %v1025 = vmax.f32 %v1009, 0.0
        %v1026 = vmax.f32 %v1010, 0.0
        %v1027 = vmax.f32 %v1011, 0.0
        %v1028 = vmax.f32 %v1012, 0.0
        %v1029 = vmax.f32 %v1013, 0.0
        %v1030 = vmax.f32 %v1014, 0.0
        %v1031 = vmax.f32 %v1015, 0.0
        %v1032 = vmax.f32 %v1016, 0.0
        %v1033 = vmax.f32 %v1017, 0.0
        %v1034 = vmax.f32 %v1018, 0.0
        %v1035 = vmax.f32 %v1019, 0.0
        %v1036 = vmax.f32 %v1020, 0.0
        %v1037 = vmax.f32 %v1021, 0.0
        %1038 = vst [vmem:[%s241] sm:$0xff] %v1022
        %1039 = vst [vmem:[%s241 + $0x8] sm:$0xff] %v1023
        %1040 = vst [vmem:[%s241 + $0x10] sm:$0xff] %v1024
        %1041 = vst [vmem:[%s241 + $0x18] sm:$0xff] %v1025
        %1042 = vst [vmem:[%s241 + $0x20] sm:$0xff] %v1026
        %1043 = vst [vmem:[%s241 + $0x28] sm:$0xff] %v1027
        %1044 = vst [vmem:[%s241 + $0x30] sm:$0xff] %v1028
        %1045 = vst [vmem:[%s241 + $0x38] sm:$0xff] %v1029
        %1046 = vst [vmem:[%s241 + $0x40] sm:$0xff] %v1030
        %1047 = vst [vmem:[%s241 + $0x48] sm:$0xff] %v1031
        %1048 = vst [vmem:[%s241 + $0x50] sm:$0xff] %v1032
        %1049 = vst [vmem:[%s241 + $0x58] sm:$0xff] %v1033
        %1050 = vst [vmem:[%s241 + $0x60] sm:$0xff] %v1034
        %1051 = vst [vmem:[%s241 + $0x68] sm:$0xff] %v1035
        %1052 = vst [vmem:[%s241 + $0x70] sm:$0xff] %v1036
        %1053 = vst [vmem:[%s241 + $0x78] sm:$0xff] %v1037
        %s1054 = sand.u32 %s138, 1
        %s1055 = scalar_lea.sflag [#allocation3], %s1054
        %s1056 = sand.u32 %s138, 1
        %s1057 = smul.addr %s1056, 128
        %s1058 = scalar_lea.vmem [#allocation2], %s1057
        // Predicated region
        $region37: #{mres_conv_forward.3} parent=35 // pred_check
          %p1059 = pneg %p148
        $region38: #{mres_conv_forward.3} parent=35 // pred_check_branch
          %1061 = sbr.rel (%p1059) target = $region40
        $region39: #{mres_conv_forward.3} parent=35 // pred_region
          %s1062 = smul.u32 8, %s23
          %s1064 = ssub.s32 2048, 2048
          %1065 = vsyncadd %s1055, %s1064
          %s1066 = smul.addr %s22, 16
          %s1067 = sadd.s32 %s1062, %s1066
          %s1068 = smul.addr %s1067, 128
          %s1069 = scalar_lea.hbm %s4, %s1068
          %s1070 = sshll.u32 %s1058, 4
          %s1071 = int_to_ptr.vmem [resolvable:$true] %s1070
          %1076 = dma.vmem_to_hbm [thread:$0]  %s1071, 2048, %s1069, %s1055, 1024, 1024, 64
        $region40: #{mres_conv_forward.3} parent=35 // pred_fallthru
          _
      $region36: #{mres_conv_forward.3} parent=5 // pred_fallthru
        _
      %p1077 = scmp.le.s32.totalorder 2, %s13
      // Predicated region
      $region41: #{mres_conv_forward.3} parent=5 // pred_check
        %p1078 = pneg %p1077
      $region42: #{mres_conv_forward.3} parent=5 // pred_check_branch
        %1080 = sbr.rel (%p1078) target = $region44
      $region43: #{mres_conv_forward.3} parent=5 // pred_region
        %s1081 = ssub.s32 %s13, 2
        // Predicated region
        $region45: #{mres_conv_forward.3} parent=43 // pred_check
          %p1082 = pneg %p154
        $region46: #{mres_conv_forward.3} parent=43 // pred_check_branch
          %1084 = sbr.rel (%p1082) target = $region48
        $region47: #{mres_conv_forward.3} parent=43 // pred_region
          %s1085 = sand.u32 %s139, 1
          %s1086 = scalar_lea.sflag [#allocation3], %s1085
          %s1087 = sand.u32 %s139, 1
          %s1088 = smul.addr %s1087, 128
          %s1089 = scalar_lea.vmem [#allocation2], %s1088
          %1090 = dma.done %s1086, 2048
        $region48: #{mres_conv_forward.3} parent=43 // pred_fallthru
          _
      $region44: #{mres_conv_forward.3} parent=5 // pred_fallthru
        _
    $region6: #{mres_conv_forward.3} parent=1 // loop_footer
      %s17 = sadd.s32 1, %s13
    $region7: #{mres_conv_forward.3} parent=1 // loop_footer_branch
      %12 = sbr.rel target = $region3
    $region8: #{mres_conv_forward.3} parent=1 // loop_exit
      _
    %1091 = vsyncpa [#allocation3], 1
    %s1092 = scalar_lea.sflag [#allocation3], 1
    %1093 = vsyncpa %s1092, 1

</llo_original>
